<compile_context>
chip_gen: v5e
topology: v5e:2x2
jax: 0.10.0
libtpu: 0.0.40
codegen_flags: <defaults>
</compile_context>

<pallas_src>
import math
from functools import partial

import jax
import jax.numpy as jnp
from jax.experimental import pallas as pl
from jax.experimental.pallas import tpu as pltpu

# ----------------------------------------------------------------------------
# Global (small) problem sizes consistent with the module's forward pass.
# ----------------------------------------------------------------------------
B = 2
IMG = 128                      # stands in for the hard-coded 512 in the module
SENT_T = 16                    # Sentinel time depth  (16 -> 8 -> 4 -> 2 -> 1)
SENT_HW = IMG // 16 + 8        # Sentinel spatial so conv5..7 end at IMG/16


def _round_up(x, m):
    return ((x + m - 1) // m) * m


def _pick_tile(dim, cands=(512, 256, 128)):
    """Largest tile from `cands` that divides the (already 128-padded) dim."""
    for c in cands:
        if dim % c == 0:
            return c
    return dim


# ----------------------------------------------------------------------------
# In-kernel activations: exp on EUP + approx reciprocal on EUP (off the VALU).
# ----------------------------------------------------------------------------
def _stable_sigmoid(r):
    e = jnp.exp(-jnp.abs(r))
    inv = pl.reciprocal(1.0 + e, approx=True)
    return jnp.where(r >= 0, inv, e * inv)


def _apply_act(r, act):
    if act == "lrelu":
        return jnp.where(r >= 0, r, 0.1 * r)      # negative_slope=0.1 (as in MyNet2)
    if act == "silu":
        return r * _stable_sigmoid(r)
    if act == "sigmoid":
        return _stable_sigmoid(r)
    return r


# ----------------------------------------------------------------------------
# Pallas kernel 1: tiled bf16 matmul + bias + activation (the conv hot path)
# ----------------------------------------------------------------------------
def _mm_kernel(a_ref, b_ref, bias_ref, o_ref, acc_ref, *, act):
    @pl.when(pl.program_id(2) == 0)
    def _():
        acc_ref[...] = jnp.zeros_like(acc_ref)

    acc_ref[...] += jnp.dot(a_ref[...], b_ref[...],
                            preferred_element_type=jnp.float32)

    @pl.when(pl.program_id(2) == pl.num_programs(2) - 1)
    def _():
        o_ref[...] = _apply_act(acc_ref[...] + bias_ref[...], act)


def _matmul_bias_act(a, w_p, b, act):
    """a: (M, K) f32; w_p: (Kp, Np) pre-padded bf16; b: (n,) f32 -> (M, n) f32."""
    M, K = a.shape
    Kp, Np = w_p.shape
    n = b.shape[0]

    # Tile selection: big tiles for HBM roofline, but keep >=2 tiles on a
    # parallel axis for large M (v7x megacore).
    if M >= 1024:
        tm = 512
    elif M >= 256:
        tm = 256
    elif M >= 128:
        tm = 128
    else:
        tm = max(8, _round_up(M, 8))
    Mp = _round_up(M, tm)
    tk = _pick_tile(Kp)
    tn = _pick_tile(Np)

    a_bf = a.astype(jnp.bfloat16)                    # MXU-native, halves HBM reads
    if (Mp, Kp) != (M, K):                           # skip the pad copy when aligned
        a_bf = jnp.zeros((Mp, Kp), jnp.bfloat16).at[:M, :K].set(a_bf)
    b_p = jnp.zeros((1, Np), jnp.float32).at[0, :n].set(b)

    out = pl.pallas_call(
        partial(_mm_kernel, act=act),
        out_shape=jax.ShapeDtypeStruct((Mp, Np), jnp.float32),
        grid_spec=pltpu.PrefetchScalarGridSpec(
            num_scalar_prefetch=0,
            grid=(Mp // tm, Np // tn, Kp // tk),
            in_specs=[
                pl.BlockSpec((tm, tk), lambda i, j, k: (i, k)),
                pl.BlockSpec((tk, tn), lambda i, j, k: (k, j)),
                pl.BlockSpec((1, tn), lambda i, j, k: (0, j)),
            ],
            out_specs=pl.BlockSpec((tm, tn), lambda i, j, k: (i, j)),
            scratch_shapes=[pltpu.VMEM((tm, tn), jnp.float32)],
        ),
        compiler_params=pltpu.CompilerParams(
            dimension_semantics=("parallel", "parallel", "arbitrary"),
            vmem_limit_bytes=48 * 1024 * 1024),
    )(a_bf, w_p, b_p)
    if Mp != M or Np != n:
        out = out[:M, :n]
    return out


# ----------------------------------------------------------------------------
# Pallas kernel 2: 3x3 depthwise conv, in-kernel shifted taps (no im2col)
# ----------------------------------------------------------------------------
def _dw_kernel(x_ref, w_ref, b_ref, o_ref, *, Ho, Wo, act):
    acc = jnp.zeros(o_ref.shape, jnp.float32)
    for di in range(3):
        for dj in range(3):
            tap = x_ref[:, di:di + Ho, dj:dj + Wo, :]          # (B, Ho, Wo, tc)
            acc = acc + tap * w_ref[di * 3 + dj, :][None, None, None, :]
    acc = acc + b_ref[0, :][None, None, None, :]
    o_ref[...] = _apply_act(acc, act)


@partial(jax.jit, static_argnames=("stride", "act"))
def depthwise_conv2d(x, w_p, b, stride=1, act="silu"):
    """3x3 depthwise conv, padding=1.  w_p: (9, Cp) f32, b: (C,) f32."""
    Bn, H, W, C = x.shape
    Cp = w_p.shape[1]
    if Cp != C:
        x = jnp.pad(x, ((0, 0), (0, 0), (0, 0), (0, Cp - C)))
    x = jnp.pad(x, ((0, 0), (1, 1), (1, 1), (0, 0)))            # spatial halo
    Hp, Wp = H + 2, W + 2
    b_p = jnp.zeros((1, Cp), jnp.float32).at[0, :C].set(b)
    tc = 256 if Cp % 256 == 0 else 128                          # VMEM-safe on v7x

    out = pl.pallas_call(
        partial(_dw_kernel, Ho=H, Wo=W, act=act),
        out_shape=jax.ShapeDtypeStruct((Bn, H, W, Cp), jnp.float32),
        grid_spec=pltpu.PrefetchScalarGridSpec(
            num_scalar_prefetch=0,
            grid=(Cp // tc,),
            in_specs=[
                pl.BlockSpec((Bn, Hp, Wp, tc), lambda c: (0, 0, 0, c)),
                pl.BlockSpec((9, tc), lambda c: (0, c)),
                pl.BlockSpec((1, tc), lambda c: (0, c)),
            ],
            out_specs=pl.BlockSpec((Bn, H, W, tc), lambda c: (0, 0, 0, c)),
        ),
        compiler_params=pltpu.CompilerParams(dimension_semantics=("parallel",)),
    )(x, w_p, b_p)
    if stride == 2:
        # stride-2 dw == stride-1 dw sampled at even positions (tiny 16x16 maps).
        out = out[:, ::2, ::2, :]
    return out[..., :C]


# ----------------------------------------------------------------------------
# Conv wrappers (im2col glue in plain JAX inside the same jit, compute in Pallas)
# ----------------------------------------------------------------------------
@partial(jax.jit, static_argnames=("kh", "kw", "stride", "padding", "act"))
def conv2d(x, w_p, b, kh, kw, stride=1, padding=0, act="none"):
    Bn, H, W, C = x.shape
    cout = b.shape[0]
    if padding > 0:
        x = jnp.pad(x, ((0, 0), (padding, padding), (padding, padding), (0, 0)))
    Hp, Wp = x.shape[1], x.shape[2]
    Ho = (Hp - kh) // stride + 1
    Wo = (Wp - kw) // stride + 1
    if kh == 1 and kw == 1 and stride == 1:
        patches = x.reshape(Bn * Ho * Wo, C)
    else:
        # TODO(synk): large 3x3 convs still use im2col; a tap-accumulating matmul
        # grid (9 shifted index_maps on the NHWC tensor) would avoid the 9x HBM
        # patch expansion on the biggest decod/stem layers.
        taps = [x[:, di:di + Ho * stride:stride, dj:dj + Wo * stride:stride, :]
                for di in range(kh) for dj in range(kw)]
        patches = jnp.stack(taps, axis=3).reshape(Bn * Ho * Wo, kh * kw * C)
    out = _matmul_bias_act(patches, w_p, b, act)
    return out.reshape(Bn, Ho, Wo, cout)


@partial(jax.jit, static_argnames=("kd", "kh", "kw", "stride", "act"))
def conv3d(x, w_p, b, kd, kh, kw, stride=(1, 1, 1), act="none"):
    Bn, D, H, W, C = x.shape
    cout = b.shape[0]
    sd, sh, sw = stride
    Do = (D - kd) // sd + 1
    Ho = (H - kh) // sh + 1
    Wo = (W - kw) // sw + 1
    taps = [x[:, dd:dd + Do * sd:sd, di:di + Ho * sh:sh, dj:dj + Wo * sw:sw, :]
            for dd in range(kd) for di in range(kh) for dj in range(kw)]
    patches = jnp.stack(taps, axis=4).reshape(Bn * Do * Ho * Wo, kd * kh * kw * C)
    out = _matmul_bias_act(patches, w_p, b, act)
    return out.reshape(Bn, Do, Ho, Wo, cout)


def conv2d_p(x, p, stride=1, padding=0, act="none"):
    return conv2d(x, p["w"], p["b"], p["kh"], p["kw"],
                  stride=stride, padding=padding, act=act)


def conv3d_p(x, p, stride=(1, 1, 1), act="none"):
    return conv3d(x, p["w"], p["b"], p["kd"], p["kh"], p["kw"],
                  stride=stride, act=act)


def depthwise_p(x, p, stride=1, act="silu"):
    return depthwise_conv2d(x, p["w"], p["b"], stride=stride, act=act)


# ----------------------------------------------------------------------------
# Deterministic parameter initialization (BN folded; weights pre-padded/bf16 once)
# ----------------------------------------------------------------------------
class KeyGen:
    def __init__(self, seed):
        self.root = jax.random.PRNGKey(seed)
        self.i = 0

    def __call__(self):
        self.i += 1
        return jax.random.fold_in(self.root, self.i)


def _prep_conv_weight(w, b):
    """Reshape to (K, N), pad to multiples of 128, cast to bf16 ONCE at init."""
    cout = w.shape[-1]
    K = int(math.prod(w.shape[:-1]))
    w2 = w.reshape(K, cout).astype(jnp.bfloat16)
    Kp, Np = _round_up(K, 128), _round_up(cout, 128)
    w_p = jnp.zeros((Kp, Np), jnp.bfloat16).at[:K, :cout].set(w2)
    return {"w": w_p, "b": b.astype(jnp.float32)}


def _conv2d_init(key, kh, kw, cin, cout):
    k1, k2 = jax.random.split(key)
    w = jax.random.normal(k1, (kh, kw, cin, cout), jnp.float32) / math.sqrt(kh * kw * cin)
    b = 0.01 * jax.random.normal(k2, (cout,), jnp.float32)
    p = _prep_conv_weight(w, b)
    p.update(kh=kh, kw=kw)
    return p


def _conv3d_init(key, kd, kh, kw, cin, cout):
    k1, k2 = jax.random.split(key)
    w = jax.random.normal(k1, (kd, kh, kw, cin, cout), jnp.float32) / math.sqrt(kd * kh * kw * cin)
    b = 0.01 * jax.random.normal(k2, (cout,), jnp.float32)
    p = _prep_conv_weight(w, b)
    p.update(kd=kd, kh=kh, kw=kw)
    return p


def _dense_init(key, cin, cout):
    k1, k2 = jax.random.split(key)
    w = jax.random.normal(k1, (cin, cout), jnp.float32) / math.sqrt(cin)
    b = 0.01 * jax.random.normal(k2, (cout,), jnp.float32)
    return (w, b)


def _dw_init(key, c):
    k1, k2 = jax.random.split(key)
    w = jax.random.normal(k1, (9, c), jnp.float32) / 3.0
    b = 0.01 * jax.random.normal(k2, (c,), jnp.float32)
    Cp = _round_up(c, 128)
    w_p = jnp.zeros((9, Cp), jnp.float32).at[:, :c].set(w)
    return {"w": w_p, "b": b}


# EfficientNetV2-S feature stages 1..5 (stages 6,7 are deleted in MyNet2):
# (block_type, expand_ratio, first_stride, in_c, out_c, num_layers)
BACKBONE_CFG = [
    ("fused", 1, 1, 24, 24, 2),
    ("fused", 4, 2, 24, 48, 4),
    ("fused", 4, 2, 48, 64, 4),
    ("mb",    4, 2, 64, 128, 6),
    ("mb",    6, 1, 128, 160, 9),
]


def init_params(seed=0):
    kg = KeyGen(seed)
    P = {}
    P["stem"] = _conv2d_init(kg(), 3, 3, 6, 24)        # modified first conv: 6 in-channels
    stages = []
    for (btype, expand, stride, cin, cout, layers) in BACKBONE_CFG:
        stage = []
        for li in range(layers):
            icin = cin if li == 0 else cout
            exp_c = icin * expand
            layer = {}
            if btype == "fused":
                if expand == 1:
                    layer["expand"] = _conv2d_init(kg(), 3, 3, icin, cout)
                else:
                    layer["expand"] = _conv2d_init(kg(), 3, 3, icin, exp_c)
                    layer["proj"] = _conv2d_init(kg(), 1, 1, exp_c, cout)
            else:
                sq = max(1, icin // 4)
                layer["expand"] = _conv2d_init(kg(), 1, 1, icin, exp_c)
                layer["dw"] = _dw_init(kg(), exp_c)
                layer["se1"] = _dense_init(kg(), exp_c, sq)
                layer["se2"] = _dense_init(kg(), sq, exp_c)
                layer["proj"] = _conv2d_init(kg(), 1, 1, exp_c, cout)
            stage.append(layer)
        stages.append(stage)
    P["stages"] = stages
    P["classiflow"] = _conv2d_init(kg(), 1, 1, 160, 13)
    P["conv1"] = _conv3d_init(kg(), 2, 1, 1, 10, 32)
    P["conv2"] = _conv3d_init(kg(), 2, 1, 1, 32, 64)
    P["conv3"] = _conv3d_init(kg(), 3, 3, 3, 64, 92)
    P["conv4"] = _conv3d_init(kg(), 2, 1, 1, 92, 128)
    P["conv5"] = _conv2d_init(kg(), 3, 3, 256, 160)
    P["conv6"] = _conv2d_init(kg(), 3, 3, 160, 160)
    P["conv7"] = _conv2d_init(kg(), 3, 3, 160, 160)
    P["merge1"] = _conv2d_init(kg(), 1, 1, 320, 512)
    P["merge2"] = _conv2d_init(kg(), 1, 1, 672, 768)
    P["merge3"] = _conv2d_init(kg(), 1, 1, 928, 160)
    P["decod1"] = _conv2d_init(kg(), 1, 1, 368, 208)
    P["decod2"] = _conv2d_init(kg(), 1, 1, 416, 208)
    P["decod3"] = _conv2d_init(kg(), 3, 3, 416, 208)
    P["decod4"] = _conv2d_init(kg(), 3, 3, 416, 304)
    P["classif"] = _conv2d_init(kg(), 1, 1, 512, 13)
    return P


# ----------------------------------------------------------------------------
# Backbone blocks (eval semantics: stochastic depth = identity, BN folded)
# ----------------------------------------------------------------------------
def run_fused(x, layer, stride, cin, cout, expand):
    inp = x
    x = conv2d_p(x, layer["expand"], stride=stride, padding=1, act="silu")
    if expand != 1:
        x = conv2d_p(x, layer["proj"], stride=1, padding=0, act="none")
    if stride == 1 and cin == cout:
        x = x + inp
    return x


def run_mbconv(x, layer, stride, cin, cout, expand):
    inp = x
    x = conv2d_p(x, layer["expand"], stride=1, padding=0, act="silu")
    x = depthwise_p(x, layer["dw"], stride=stride, act="silu")
    # Squeeze-Excitation kept in plain XLA: M = batch = 2, so a Pallas launch
    # (pipeline startup + tile padding) would cost more than the math itself.
    w1, b1 = layer["se1"]
    w2, b2 = layer["se2"]
    se = jnp.mean(x, axis=(1, 2))
    se = jax.nn.silu(se @ w1 + b1)
    se = jax.nn.sigmoid(se @ w2 + b2)
    x = x * se[:, None, None, :]
    x = conv2d_p(x, layer["proj"], stride=1, padding=0, act="none")
    if stride == 1 and cin == cout:
        x = x + inp
    return x


def run_stage(x, stage_params, cfg):
    btype, expand, stride, cin, cout, _ = cfg
    for li, layer in enumerate(stage_params):
        s = stride if li == 0 else 1
        ic = cin if li == 0 else cout
        if btype == "fused":
            x = run_fused(x, layer, s, ic, cout, expand)
        else:
            x = run_mbconv(x, layer, s, ic, cout, expand)
    return x


def _resize_bilinear(x, hw):
    # TODO(synk): F.interpolate(mode='bilinear', align_corners=False) kept as
    # jax.image.resize glue (no clean Pallas equivalent worth the launch cost).
    Bn, _, _, C = x.shape
    return jax.image.resize(x, (Bn, hw, hw, C), method="bilinear")


# ----------------------------------------------------------------------------
# MyNet2 forward
# ----------------------------------------------------------------------------
def forward_rgb(P, x):
    Bn = x.shape[0]
    xm = jnp.zeros((Bn, IMG, IMG, 1), x.dtype)
    x = (x / 255.0 - 0.5) / 0.5
    x = jnp.concatenate([x, xm], axis=-1)                 # 6 channels
    x = conv2d_p(x, P["stem"], stride=2, padding=1, act="silu")  # backbone[0]
    x = run_stage(x, P["stages"][0], BACKBONE_CFG[0])            # backbone[1]
    hr = run_stage(x, P["stages"][1], BACKBONE_CFG[1])           # backbone[2]
    x = run_stage(hr, P["stages"][2], BACKBONE_CFG[2])           # backbone[3]
    x = run_stage(x, P["stages"][3], BACKBONE_CFG[3])            # backbone[4]
    x = run_stage(x, P["stages"][4], BACKBONE_CFG[4])            # backbone[5]
    plow = conv2d_p(x, P["classiflow"], stride=1, padding=0, act="none")
    plow = _resize_bilinear(plow, IMG)
    return plow, x, hr


def forward_sentinel(P, s):
    s = conv3d_p(s, P["conv1"], stride=(2, 1, 1), act="lrelu")
    s = conv3d_p(s, P["conv2"], stride=(2, 1, 1), act="lrelu")
    s = conv3d_p(s, P["conv3"], stride=(1, 1, 1), act="lrelu")
    s = conv3d_p(s, P["conv4"], stride=(2, 1, 1), act="lrelu")
    ss = jnp.mean(s, axis=1)
    smax = jnp.max(s, axis=1)
    s = jnp.concatenate([smax, ss], axis=-1)               # 256 channels
    s = conv2d_p(s, P["conv5"], stride=1, padding=0, act="lrelu")
    s = conv2d_p(s, P["conv6"], stride=1, padding=0, act="lrelu")
    s = conv2d_p(s, P["conv7"], stride=1, padding=0, act="lrelu")
    return s


def expand4(x):
    # PyTorch writes x into every (i, j) offset in 0..3 of a 4x-strided grid, so
    # all 16 positions are filled -> equivalent to 4x nearest-neighbour repeat.
    return jnp.repeat(jnp.repeat(x, 4, axis=1), 4, axis=2)


def forward_classifier(P, x, hr, s):
    xs = jnp.concatenate([x, s], axis=-1)
    xs = conv2d_p(xs, P["merge1"], 1, 0, act="lrelu")
    xs = jnp.concatenate([x, xs], axis=-1)
    xs = conv2d_p(xs, P["merge2"], 1, 0, act="lrelu")
    xs = jnp.concatenate([x, xs], axis=-1)
    xs = conv2d_p(xs, P["merge3"], 1, 0, act="lrelu")
    f1 = expand4(x)
    f2 = expand4(xs)
    f = jnp.concatenate([f1, f2, hr], axis=-1)
    f2 = conv2d_p(f, P["decod1"], 1, 0, act="lrelu")
    f = jnp.concatenate([f1, f2, hr], axis=-1)
    f2 = conv2d_p(f, P["decod2"], 1, 0, act="lrelu")
    f = jnp.concatenate([f1, f2, hr], axis=-1)
    f2 = conv2d_p(f, P["decod3"], 1, 1, act="lrelu")
    f = jnp.concatenate([f1, f2, hr], axis=-1)
    f2 = conv2d_p(f, P["decod4"], 1, 1, act="lrelu")
    f = jnp.concatenate([f1, f2, hr], axis=-1)
    p = conv2d_p(f, P["classif"], 1, 0, act="none")
    return p


def mynet2_forward(P, x, s):
    plow, x, hr = forward_rgb(P, x)
    s = forward_sentinel(P, s)
    p = forward_classifier(P, x, hr, s)
    p = _resize_bilinear(p, IMG)
    return p + 0.1 * plow


# ----------------------------------------------------------------------------
if __name__ == "__main__":
    key = jax.random.PRNGKey(0)
    kx, ks = jax.random.split(key)
    # x: aerial image, 5 channels (a 6th zero channel is concatenated inside),
    #    NHWC (PyTorch reference: NCHW [B, 5, 512, 512], scaled to 128 here).
    x = jax.random.uniform(kx, (B, IMG, IMG, 5), jnp.float32, 0.0, 255.0)
    # s: Sentinel time series, NDHWC (PyTorch reference: NCDHW [B, 10, T, H, W]).
    s = jax.random.normal(ks, (B, SENT_T, SENT_HW, SENT_HW, 10), jnp.float32)

    params = init_params(seed=0)
    out = mynet2_forward(params, x, s)
    out = jax.block_until_ready(out)
    assert out.shape == (B, IMG, IMG, 13), out.shape
    assert bool(jnp.all(jnp.isfinite(out)))
    print("KERNEL_OK")
</pallas_src>

<mosaic_0001>
module attributes {stable_mosaic.version = 11 : i64} {
  func.func @_mm_kernel(%arg0: i32, %arg1: i32, %arg2: i32, %arg3: memref<512x128xbf16, #tpu.memory_space<vmem>>, %arg4: memref<128x128xbf16, #tpu.memory_space<vmem>>, %arg5: memref<1x128xf32, #tpu.memory_space<vmem>>, %arg6: memref<512x128xf32, #tpu.memory_space<vmem>>, %arg7: memref<512x128xf32, #tpu.memory_space<vmem>>) attributes {dimension_semantics = [#tpu.dimension_semantics<parallel>, #tpu.dimension_semantics<parallel>, #tpu.dimension_semantics<arbitrary>], iteration_bounds = array<i64: 16, 1, 1>, scalar_prefetch = 0 : i64, scratch_operands = 1 : i64, tpu.core_type = #tpu.core_type<tc>, window_params = [{transform_indices = @transform_0, window_bounds = array<i64: 512, 128>}, {transform_indices = @transform_1, window_bounds = array<i64: 128, 128>}, {transform_indices = @transform_2, window_bounds = array<i64: 1, 128>}, {transform_indices = @transform_3, window_bounds = array<i64: 512, 128>}]} {
    %c0_i32 = arith.constant 0 : i32
    %0 = arith.cmpi eq, %arg2, %c0_i32 : i32
    %1 = arith.extui %0 : i1 to i32
    %c0_i32_0 = arith.constant 0 : i32
    %2 = arith.cmpi ne, %1, %c0_i32_0 : i32
    scf.if %2 {
      %cst_10 = arith.constant 0.000000e+00 : f32
      %12 = vector.broadcast %cst_10 : f32 to vector<512x128xf32>
      %c0_11 = arith.constant 0 : index
      %c0_12 = arith.constant 0 : index
      %13 = vector.load %arg7[%c0_11, %c0_12] : memref<512x128xf32, #tpu.memory_space<vmem>>, vector<512x128xf32>
      tpu.vector_store %arg7[%c0_11, %c0_12], %12 {strides = array<i32>} : memref<512x128xf32, #tpu.memory_space<vmem>>, vector<512x128xf32>,
    } else {
    }
    %c0 = arith.constant 0 : index
    %c0_1 = arith.constant 0 : index
    %3 = vector.load %arg7[%c0, %c0_1] : memref<512x128xf32, #tpu.memory_space<vmem>>, vector<512x128xf32>
    %c0_2 = arith.constant 0 : index
    %c0_3 = arith.constant 0 : index
    %4 = vector.load %arg3[%c0_2, %c0_3] : memref<512x128xbf16, #tpu.memory_space<vmem>>, vector<512x128xbf16>
    %c0_4 = arith.constant 0 : index
    %c0_5 = arith.constant 0 : index
    %5 = vector.load %arg4[%c0_4, %c0_5] : memref<128x128xbf16, #tpu.memory_space<vmem>>, vector<128x128xbf16>
    %cst = arith.constant dense<0.000000e+00> : vector<512x128xf32>
    %6 = tpu.matmul %4, %5, %cst {dimension_numbers = #tpu.dot_dimension_numbers<[1], [0], [0], [1], [0, 0, 1, 1], [], []>} : vector<512x128xbf16>, vector<128x128xbf16>, vector<512x128xf32> -> vector<512x128xf32>
    %7 = arith.addf %3, %6 : vector<512x128xf32>
    %c0_6 = arith.constant 0 : index
    %c0_7 = arith.constant 0 : index
    %8 = vector.load %arg7[%c0_6, %c0_7] : memref<512x128xf32, #tpu.memory_space<vmem>>, vector<512x128xf32>
    tpu.vector_store %arg7[%c0_6, %c0_7], %7 {strides = array<i32>} : memref<512x128xf32, #tpu.memory_space<vmem>>, vector<512x128xf32>,
    %c0_i32_8 = arith.constant 0 : i32
    %9 = arith.cmpi eq, %arg2, %c0_i32_8 : i32
    %10 = arith.extui %9 : i1 to i32
    %c0_i32_9 = arith.constant 0 : i32
    %11 = arith.cmpi ne, %10, %c0_i32_9 : i32
    scf.if %11 {
      %c0_10 = arith.constant 0 : index
      %c0_11 = arith.constant 0 : index
      %12 = vector.load %arg7[%c0_10, %c0_11] : memref<512x128xf32, #tpu.memory_space<vmem>>, vector<512x128xf32>
      %c0_12 = arith.constant 0 : index
      %c0_13 = arith.constant 0 : index
      %13 = vector.load %arg5[%c0_12, %c0_13] : memref<1x128xf32, #tpu.memory_space<vmem>>, vector<1x128xf32>
      %14 = vector.broadcast %13 : vector<1x128xf32> to vector<512x128xf32>
      %15 = arith.addf %12, %14 : vector<512x128xf32>
      %16 = math.absf %15 : vector<512x128xf32>
      %cst_14 = arith.constant 0.000000e+00 : f32
      %17 = vector.broadcast %cst_14 : f32 to vector<512x128xf32>
      %18 = arith.subf %17, %16 : vector<512x128xf32>
      %19 = math.exp %18 : vector<512x128xf32>
      %cst_15 = arith.constant 1.000000e+00 : f32
      %20 = vector.broadcast %cst_15 : f32 to vector<512x128xf32>
      %21 = arith.addf %20, %19 : vector<512x128xf32>
      %22 = tpu.reciprocal %21 {approx = true} : vector<512x128xf32> -> vector<512x128xf32>
      %cst_16 = arith.constant 0.000000e+00 : f32
      %23 = vector.broadcast %cst_16 : f32 to vector<512x128xf32>
      %24 = arith.cmpf oge, %15, %23 : vector<512x128xf32>
      %25 = arith.mulf %19, %22 : vector<512x128xf32>
      %26 = arith.select %24, %22, %25 : vector<512x128xi1>, vector<512x128xf32>
      %27 = arith.mulf %15, %26 : vector<512x128xf32>
      %c0_17 = arith.constant 0 : index
      %c0_18 = arith.constant 0 : index
      %28 = vector.load %arg6[%c0_17, %c0_18] : memref<512x128xf32, #tpu.memory_space<vmem>>, vector<512x128xf32>
      tpu.vector_store %arg6[%c0_17, %c0_18], %27 {strides = array<i32>} : memref<512x128xf32, #tpu.memory_space<vmem>>, vector<512x128xf32>,
    } else {
    }
    return
  }
  func.func @transform_0(%arg0: i32, %arg1: i32, %arg2: i32) -> (i32, i32) {
    %c0_i32 = arith.constant 0 : i32
    return %arg0, %arg2 : i32, i32
  }
  func.func @transform_1(%arg0: i32, %arg1: i32, %arg2: i32) -> (i32, i32) {
    %c0_i32 = arith.constant 0 : i32
    return %arg2, %arg1 : i32, i32
  }
  func.func @transform_2(%arg0: i32, %arg1: i32, %arg2: i32) -> (i32, i32) {
    %c0_i32 = arith.constant 0 : i32
    %c0_i32_0 = arith.constant 0 : i32
    return %c0_i32, %arg1 : i32, i32
  }
  func.func @transform_3(%arg0: i32, %arg1: i32, %arg2: i32) -> (i32, i32) {
    %c0_i32 = arith.constant 0 : i32
    return %arg0, %arg1 : i32, i32
  }
}

</mosaic_0001>

<llo_original>
// kernel: conv2d.1
$region0: #{conv2d.1}
  #allocation0 [shape = 'u32[]', space=smem, size = 0x4, offset = 0x4, fixed_abs, tag = 'smem constant byte address 0x4 - core index']
  #allocation1 [shape = 'u32[72,128]{1,0:T(1,128)}', space=vmem, size = 0x9000, scoped, tag = 'internal scratch']
  #allocation2 [shape = 'f32[512,128]{1,0:T(8,128)}', space=vmem, size = 0x40000, scoped, tag = 'scratch operand']
  %s0 = inlined_call_operand.vmem [shape: bf16[8192,128], index: 0, kind: input, shape index: {}]
  %s1 = inlined_call_operand.vmem [shape: bf16[128,128], index: 1, kind: input, shape index: {}]
  %s2 = inlined_call_operand.vmem [shape: f32[1,128], index: 2, kind: input, shape index: {}]
  %s3 = inlined_call_operand.vmem [shape: f32[8192,128], index: 3, kind: output, shape index: {}]
  %s4 = sld [smem:[#allocation0]]
  $region53: #{conv2d.1} parent=0
    _
  %s6 = ssub.s32 1, %s4
  %s7 = scalar_select 0, %s6, %s4
  loop: start=0, step=1, limit=18
  $region2: #{conv2d.1} parent=0 // loop_pre_header
    _
  $region3: #{conv2d.1} parent=0 // loop_header
    %s9 = sphi 0, %s13
    %p10 = scmp.ge.s32.totalorder %s9, 18
    %s16 = sphi 0, %s35
    %s17 = sphi 0, %s31
    %s18 = sphi 0, %s27
    %s19 = sphi 0, %s16
    %s20 = sphi 0, %s17
    %s21 = sphi 0, %s18
    %s22 = sphi 0, %s19
    %s23 = sphi 0, %s20
    %s24 = sphi 0, %s21
    %s40 = sphi 0, %s42
    %s43 = sphi 0, %s40
    %s44 = sphi 0, %s43
    %s60 = sphi 0, %s44
    %s68 = sphi 0, %s70
    %s71 = sphi 0, %s68
    %s72 = sphi 0, %s71
    %s88 = sphi 0, %s72
    %s94 = sphi 0, %s96
    %s97 = sphi 0, %s94
    %s98 = sphi 0, %s97
    %s114 = sphi 0, %s98
    %s122 = sphi 0, %s124
    %s125 = sphi 0, %s122
    %s126 = sphi 0, %s125
    %s142 = sphi 0, %s126
  $region4: #{conv2d.1} parent=0 // loop_header_branch
    %12 = sbr.rel (%p10) target = $region8
  $region5: #{conv2d.1} parent=0 // loop_body
    %s14 = ssub.s32 %s9, 1
    %s15 = ssub.s32 %s9, 2
    %s25 = sadd.s32 1, %s18
    %p26 = scmp.ge.s32.totalorder %s25, 1
    %s27 = scalar_select %p26, 0, %s25
    %s28 = sadd.s32 1, %s17
    %s29 = scalar_select %p26, %s28, %s17
    %p30 = scmp.ge.s32.totalorder %s29, 1
    %s31 = scalar_select %p30, 0, %s29
    %s32 = sadd.s32 1, %s16
    %s33 = scalar_select %p30, %s32, %s16
    %p34 = scmp.ge.s32.totalorder %s33, 16
    %s35 = scalar_select %p34, 0, %s33
    %s36 = ssub.s32 %s16, %s35
    %s37 = ssub.s32 %s18, %s27
    %s38 = sor.u32 %s36, %s37
    %p39 = scmp.eq.s32.totalorder %s38, 0
    %s41 = sadd.s32 %s40, 1
    %s42 = scalar_select %p39, %s40, %s41
    %p45 = pneg %p39
    %p46 = scmp.eq.s32.totalorder %s9, 15
    %p47 = por %p45, %p46
    %p48 = scmp.ne.s32.totalorder %s40, %s43
    %p49 = scmp.eq.s32.totalorder %s9, 0
    %p50 = por %p48, %p49
    %p51 = scmp.ne.s32.totalorder %s40, %s43
    %p52 = scmp.eq.s32.totalorder %s14, 15
    %p53 = por %p51, %p52
    %p54 = scmp.ne.s32.totalorder %s43, %s44
    %p55 = scmp.eq.s32.totalorder %s14, 0
    %p56 = por %p54, %p55
    %p57 = scmp.ne.s32.totalorder %s43, %s44
    %p58 = scmp.eq.s32.totalorder %s15, 15
    %p59 = por %p57, %p58
    %p61 = scmp.ne.s32.totalorder %s44, %s60
    %p62 = scmp.eq.s32.totalorder %s15, 0
    %p63 = por %p61, %p62
    %s64 = ssub.s32 %s18, %s27
    %s65 = ssub.s32 %s17, %s31
    %s66 = sor.u32 %s64, %s65
    %p67 = scmp.eq.s32.totalorder %s66, 0
    %s69 = sadd.s32 %s68, 1
    %s70 = scalar_select %p67, %s68, %s69
    %p73 = pneg %p67
    %p74 = scmp.eq.s32.totalorder %s9, 15
    %p75 = por %p73, %p74
    %p76 = scmp.ne.s32.totalorder %s68, %s71
    %p77 = scmp.eq.s32.totalorder %s9, 0
    %p78 = por %p76, %p77
    %p79 = scmp.ne.s32.totalorder %s68, %s71
    %p80 = scmp.eq.s32.totalorder %s14, 15
    %p81 = por %p79, %p80
    %p82 = scmp.ne.s32.totalorder %s71, %s72
    %p83 = scmp.eq.s32.totalorder %s14, 0
    %p84 = por %p82, %p83
    %p85 = scmp.ne.s32.totalorder %s71, %s72
    %p86 = scmp.eq.s32.totalorder %s15, 15
    %p87 = por %p85, %p86
    %p89 = scmp.ne.s32.totalorder %s72, %s88
    %p90 = scmp.eq.s32.totalorder %s15, 0
    %p91 = por %p89, %p90
    %s92 = ssub.s32 %s17, %s31
    %p93 = scmp.eq.s32.totalorder %s92, 0
    %s95 = sadd.s32 %s94, 1
    %s96 = scalar_select %p93, %s94, %s95
    %p99 = pneg %p93
    %p100 = scmp.eq.s32.totalorder %s9, 15
    %p101 = por %p99, %p100
    %p102 = scmp.ne.s32.totalorder %s94, %s97
    %p103 = scmp.eq.s32.totalorder %s9, 0
    %p104 = por %p102, %p103
    %p105 = scmp.ne.s32.totalorder %s94, %s97
    %p106 = scmp.eq.s32.totalorder %s14, 15
    %p107 = por %p105, %p106
    %p108 = scmp.ne.s32.totalorder %s97, %s98
    %p109 = scmp.eq.s32.totalorder %s14, 0
    %p110 = por %p108, %p109
    %p111 = scmp.ne.s32.totalorder %s97, %s98
    %p112 = scmp.eq.s32.totalorder %s15, 15
    %p113 = por %p111, %p112
    %p115 = scmp.ne.s32.totalorder %s98, %s114
    %p116 = scmp.eq.s32.totalorder %s15, 0
    %p117 = por %p115, %p116
    %s118 = ssub.s32 %s16, %s35
    %s119 = ssub.s32 %s17, %s31
    %s120 = sor.u32 %s118, %s119
    %p121 = scmp.eq.s32.totalorder %s120, 0
    %s123 = sadd.s32 %s122, 1
    %s124 = scalar_select %p121, %s122, %s123
    %p127 = pneg %p121
    %p128 = scmp.eq.s32.totalorder %s9, 15
    %p129 = por %p127, %p128
    %p130 = scmp.ne.s32.totalorder %s122, %s125
    %p131 = scmp.eq.s32.totalorder %s9, 0
    %p132 = por %p130, %p131
    %p133 = scmp.ne.s32.totalorder %s122, %s125
    %p134 = scmp.eq.s32.totalorder %s14, 15
    %p135 = por %p133, %p134
    %p136 = scmp.ne.s32.totalorder %s125, %s126
    %p137 = scmp.eq.s32.totalorder %s14, 0
    %p138 = por %p136, %p137
    %p139 = scmp.ne.s32.totalorder %s125, %s126
    %p140 = scmp.eq.s32.totalorder %s15, 15
    %p141 = por %p139, %p140
    %p143 = scmp.ne.s32.totalorder %s126, %s142
    %p144 = scmp.eq.s32.totalorder %s15, 0
    %p145 = por %p143, %p144
    %p146 = scmp.le.s32.totalorder 1, %s9
    %p147 = scmp.lt.s32.totalorder %s9, 17
    %p148 = pnand %p146, %p147
    %p149 = pneg %p148
    // Predicated region
    $region9: #{conv2d.1} parent=5 // pred_check
      _
    $region10: #{conv2d.1} parent=5 // pred_check_branch
      %151 = sbr.rel (%p148) target = $region12
    $region11: #{conv2d.1} parent=5 // pred_region
      %s152 = ssub.s32 %s9, 1
      // Predicated region
      $region13: #{conv2d.1} parent=11 // pred_check
        %p153 = pneg %p84
      $region14: #{conv2d.1} parent=11 // pred_check_branch
        %155 = sbr.rel (%p153) target = $region16
      $region15: #{conv2d.1} parent=11 // pred_region
        %s156 = smul.u32 16, %s21
        %p157 = scmp.lt.s32.totalorder %s156, 15
        %s158 = scalar_select %p157, %s156, 15
        %p159 = scmp.lt.s32.totalorder %s20, 0
        %s160 = scalar_select %p159, %s20, 0
        %s161 = sadd.s32 %s160, %s158
        %s162 = smul.addr %s161, 4
        %s163 = scalar_lea.vmem %s1, %s162
        %s164 = smul.u32 16, %s21
      $region16: #{conv2d.1} parent=11 // pred_fallthru
        _
      // Predicated region
      $region17: #{conv2d.1} parent=11 // pred_check
        %p165 = pneg %p110
      $region18: #{conv2d.1} parent=11 // pred_check_branch
        %167 = sbr.rel (%p165) target = $region20
      $region19: #{conv2d.1} parent=11 // pred_region
        %p168 = scmp.lt.s32.totalorder %s20, 0
        %s169 = scalar_select %p168, %s20, 0
        %s170 = scalar_lea.vmem %s2, %s169
      $region20: #{conv2d.1} parent=11 // pred_fallthru
        _
    $region12: #{conv2d.1} parent=5 // pred_fallthru
      _
    %p171 = scmp.lt.s32.totalorder %s9, 16
    // Predicated region
    $region21: #{conv2d.1} parent=5 // pred_check
      %p172 = pneg %p171
    $region22: #{conv2d.1} parent=5 // pred_check_branch
      %174 = sbr.rel (%p172) target = $region24
    $region23: #{conv2d.1} parent=5 // pred_region
      // Predicated region
      $region25: #{conv2d.1} parent=23 // pred_check
        %p175 = pneg %p50
      $region26: #{conv2d.1} parent=23 // pred_check_branch
        %177 = sbr.rel (%p175) target = $region28
      $region27: #{conv2d.1} parent=23 // pred_region
        %s178 = smul.u32 64, %s16
        %p179 = scmp.lt.s32.totalorder %s178, 1023
        %s180 = scalar_select %p179, %s178, 1023
        %p181 = scmp.lt.s32.totalorder %s18, 0
        %s182 = scalar_select %p181, %s18, 0
        %s183 = sadd.s32 %s182, %s180
        %s184 = smul.addr %s183, 4
        %s185 = scalar_lea.vmem %s0, %s184
        %s186 = smul.u32 64, %s16
      $region28: #{conv2d.1} parent=23 // pred_fallthru
        _
    $region24: #{conv2d.1} parent=5 // pred_fallthru
      _
    %p187 = scmp.le.s32.totalorder 1, %s9
    %p188 = scmp.lt.s32.totalorder %s9, 17
    %p189 = pnand %p187, %p188
    %p190 = pneg %p189
    // Predicated region
    $region29: #{conv2d.1} parent=5 // pred_check
      _
    $region30: #{conv2d.1} parent=5 // pred_check_branch
      %192 = sbr.rel (%p189) target = $region32
    $region31: #{conv2d.1} parent=5 // pred_region
      %s193 = ssub.s32 %s9, 1
      %s194 = smul.u32 64, %s19
      %p195 = scmp.lt.s32.totalorder %s194, 1023
      %s196 = scalar_select %p195, %s194, 1023
      %p197 = scmp.lt.s32.totalorder %s21, 0
      %s198 = scalar_select %p197, %s21, 0
      %s199 = sadd.s32 %s198, %s196
      %s200 = smul.addr %s199, 4
      %s201 = scalar_lea.vmem %s0, %s200
      %p202 = pneg %p56
      %p203 = pneg %p53
      %s204 = smul.u32 16, %s21
      %p205 = scmp.lt.s32.totalorder %s204, 15
      %s206 = scalar_select %p205, %s204, 15
      %p207 = scmp.lt.s32.totalorder %s20, 0
      %s208 = scalar_select %p207, %s20, 0
      %s209 = sadd.s32 %s208, %s206
      %s210 = smul.addr %s209, 4
      %s211 = scalar_lea.vmem %s1, %s210
      %p212 = pneg %p84
      %p213 = pneg %p81
      %p214 = scmp.lt.s32.totalorder %s20, 0
      %s215 = scalar_select %p214, %s20, 0
      %s216 = scalar_lea.vmem %s2, %s215
      %p217 = pneg %p110
      %p218 = pneg %p107
      %p219 = pneg %p138
      %p220 = pneg %p135
      %s221 = smul.u32 64, %s19
      %p222 = scmp.lt.s32.totalorder %s221, 1023
      %s223 = scalar_select %p222, %s221, 1023
      %p224 = scmp.lt.s32.totalorder %s20, 0
      %s225 = scalar_select %p224, %s20, 0
      %s226 = sadd.s32 %s225, %s223
      %s227 = smul.addr %s226, 8
      %s228 = scalar_lea.vmem %s3, %s227
      %s229 = smul.u32 64, %s19
      %p230 = scmp.lt.s32.totalorder %s229, 1023
      %s231 = scalar_select %p230, %s229, 1023
      %p232 = scmp.lt.s32.totalorder %s21, 0
      %s233 = scalar_select %p232, %s21, 0
      %s234 = sadd.s32 %s233, %s231
      %s235 = smul.addr %s234, 4
      %s236 = scalar_lea.vmem %s0, %s235
      %s237 = smul.u32 64, %s19
      %s238 = smul.u32 16, %s21
      %p239 = scmp.lt.s32.totalorder %s238, 15
      %s240 = scalar_select %p239, %s238, 15
      %p241 = scmp.lt.s32.totalorder %s20, 0
      %s242 = scalar_select %p241, %s20, 0
      %s243 = sadd.s32 %s242, %s240
      %s244 = smul.addr %s243, 4
      %s245 = scalar_lea.vmem %s1, %s244
      %s246 = smul.u32 16, %s21
      %p247 = scmp.lt.s32.totalorder %s20, 0
      %s248 = scalar_select %p247, %s20, 0
      %s249 = scalar_lea.vmem %s2, %s248
      %s250 = smul.u32 64, %s19
      %p251 = scmp.lt.s32.totalorder %s250, 1023
      %s252 = scalar_select %p251, %s250, 1023
      %p253 = scmp.lt.s32.totalorder %s20, 0
      %s254 = scalar_select %p253, %s20, 0
      %s255 = sadd.s32 %s254, %s252
      %s256 = smul.addr %s255, 8
      %s257 = scalar_lea.vmem %s3, %s256
      %s258 = smul.u32 64, %s19
      %p259 = scmp.eq.s32.totalorder %s21, 0
      // Predicated region
      $region33: #{conv2d.1} parent=31 // pred_check
        %p260 = pneg %p259
      $region34: #{conv2d.1} parent=31 // pred_check_branch
        %262 = sbr.rel (%p260) target = $region36
      $region35: #{conv2d.1} parent=31 // pred_region
        %263 = vst [vmem:[#allocation2] sm:$0xff] 0.0
        %264 = vst [vmem:[#allocation2 + $0x8] sm:$0xff] 0.0
        %265 = vst [vmem:[#allocation2 + $0x10] sm:$0xff] 0.0
        %266 = vst [vmem:[#allocation2 + $0x18] sm:$0xff] 0.0
        %267 = vst [vmem:[#allocation2 + $0x20] sm:$0xff] 0.0
        %268 = vst [vmem:[#allocation2 + $0x28] sm:$0xff] 0.0
        %269 = vst [vmem:[#allocation2 + $0x30] sm:$0xff] 0.0
        %270 = vst [vmem:[#allocation2 + $0x38] sm:$0xff] 0.0
        %271 = vst [vmem:[#allocation2 + $0x40] sm:$0xff] 0.0
        %272 = vst [vmem:[#allocation2 + $0x48] sm:$0xff] 0.0
        %273 = vst [vmem:[#allocation2 + $0x50] sm:$0xff] 0.0
        %274 = vst [vmem:[#allocation2 + $0x58] sm:$0xff] 0.0
        %275 = vst [vmem:[#allocation2 + $0x60] sm:$0xff] 0.0
        %276 = vst [vmem:[#allocation2 + $0x68] sm:$0xff] 0.0
        %277 = vst [vmem:[#allocation2 + $0x70] sm:$0xff] 0.0
        %278 = vst [vmem:[#allocation2 + $0x78] sm:$0xff] 0.0
        %279 = vst [vmem:[#allocation2 + $0x80] sm:$0xff] 0.0
        %280 = vst [vmem:[#allocation2 + $0x88] sm:$0xff] 0.0
        %281 = vst [vmem:[#allocation2 + $0x90] sm:$0xff] 0.0
        %282 = vst [vmem:[#allocation2 + $0x98] sm:$0xff] 0.0
        %283 = vst [vmem:[#allocation2 + $0xa0] sm:$0xff] 0.0
        %284 = vst [vmem:[#allocation2 + $0xa8] sm:$0xff] 0.0
        %285 = vst [vmem:[#allocation2 + $0xb0] sm:$0xff] 0.0
        %286 = vst [vmem:[#allocation2 + $0xb8] sm:$0xff] 0.0
        %287 = vst [vmem:[#allocation2 + $0xc0] sm:$0xff] 0.0
        %288 = vst [vmem:[#allocation2 + $0xc8] sm:$0xff] 0.0
        %289 = vst [vmem:[#allocation2 + $0xd0] sm:$0xff] 0.0
        %290 = vst [vmem:[#allocation2 + $0xd8] sm:$0xff] 0.0
        %291 = vst [vmem:[#allocation2 + $0xe0] sm:$0xff] 0.0
        %292 = vst [vmem:[#allocation2 + $0xe8] sm:$0xff] 0.0
        %293 = vst [vmem:[#allocation2 + $0xf0] sm:$0xff] 0.0
        %294 = vst [vmem:[#allocation2 + $0xf8] sm:$0xff] 0.0
        %295 = vst [vmem:[#allocation2 + $0x100] sm:$0xff] 0.0
        %296 = vst [vmem:[#allocation2 + $0x108] sm:$0xff] 0.0
        %297 = vst [vmem:[#allocation2 + $0x110] sm:$0xff] 0.0
        %298 = vst [vmem:[#allocation2 + $0x118] sm:$0xff] 0.0
        %299 = vst [vmem:[#allocation2 + $0x120] sm:$0xff] 0.0
        %300 = vst [vmem:[#allocation2 + $0x128] sm:$0xff] 0.0
        %301 = vst [vmem:[#allocation2 + $0x130] sm:$0xff] 0.0
        %302 = vst [vmem:[#allocation2 + $0x138] sm:$0xff] 0.0
        %303 = vst [vmem:[#allocation2 + $0x140] sm:$0xff] 0.0
        %304 = vst [vmem:[#allocation2 + $0x148] sm:$0xff] 0.0
        %305 = vst [vmem:[#allocation2 + $0x150] sm:$0xff] 0.0
        %306 = vst [vmem:[#allocation2 + $0x158] sm:$0xff] 0.0
        %307 = vst [vmem:[#allocation2 + $0x160] sm:$0xff] 0.0
        %308 = vst [vmem:[#allocation2 + $0x168] sm:$0xff] 0.0
        %309 = vst [vmem:[#allocation2 + $0x170] sm:$0xff] 0.0
        %310 = vst [vmem:[#allocation2 + $0x178] sm:$0xff] 0.0
        %311 = vst [vmem:[#allocation2 + $0x180] sm:$0xff] 0.0
        %312 = vst [vmem:[#allocation2 + $0x188] sm:$0xff] 0.0
        %313 = vst [vmem:[#allocation2 + $0x190] sm:$0xff] 0.0
        %314 = vst [vmem:[#allocation2 + $0x198] sm:$0xff] 0.0
        %315 = vst [vmem:[#allocation2 + $0x1a0] sm:$0xff] 0.0
        %316 = vst [vmem:[#allocation2 + $0x1a8] sm:$0xff] 0.0
        %317 = vst [vmem:[#allocation2 + $0x1b0] sm:$0xff] 0.0
        %318 = vst [vmem:[#allocation2 + $0x1b8] sm:$0xff] 0.0
        %319 = vst [vmem:[#allocation2 + $0x1c0] sm:$0xff] 0.0
        %320 = vst [vmem:[#allocation2 + $0x1c8] sm:$0xff] 0.0
        %321 = vst [vmem:[#allocation2 + $0x1d0] sm:$0xff] 0.0
        %322 = vst [vmem:[#allocation2 + $0x1d8] sm:$0xff] 0.0
        %323 = vst [vmem:[#allocation2 + $0x1e0] sm:$0xff] 0.0
        %324 = vst [vmem:[#allocation2 + $0x1e8] sm:$0xff] 0.0
        %325 = vst [vmem:[#allocation2 + $0x1f0] sm:$0xff] 0.0
        %326 = vst [vmem:[#allocation2 + $0x1f8] sm:$0xff] 0.0
      $region36: #{conv2d.1} parent=31 // pred_fallthru
        _
      %v327 = vld [vmem:[#allocation2] sm:$0xff]
      %v328 = vld [vmem:[#allocation2 + $0x8] sm:$0xff]
      %v329 = vld [vmem:[#allocation2 + $0x10] sm:$0xff]
      %v330 = vld [vmem:[#allocation2 + $0x18] sm:$0xff]
      %v331 = vld [vmem:[#allocation2 + $0x20] sm:$0xff]
      %v332 = vld [vmem:[#allocation2 + $0x28] sm:$0xff]
      %v333 = vld [vmem:[#allocation2 + $0x30] sm:$0xff]
      %v334 = vld [vmem:[#allocation2 + $0x38] sm:$0xff]
      %v335 = vld [vmem:[#allocation2 + $0x40] sm:$0xff]
      %v336 = vld [vmem:[#allocation2 + $0x48] sm:$0xff]
      %v337 = vld [vmem:[#allocation2 + $0x50] sm:$0xff]
      %v338 = vld [vmem:[#allocation2 + $0x58] sm:$0xff]
      %v339 = vld [vmem:[#allocation2 + $0x60] sm:$0xff]
      %v340 = vld [vmem:[#allocation2 + $0x68] sm:$0xff]
      %v341 = vld [vmem:[#allocation2 + $0x70] sm:$0xff]
      %v342 = vld [vmem:[#allocation2 + $0x78] sm:$0xff]
      %v343 = vld [vmem:[#allocation2 + $0x80] sm:$0xff]
      %v344 = vld [vmem:[#allocation2 + $0x88] sm:$0xff]
      %v345 = vld [vmem:[#allocation2 + $0x90] sm:$0xff]
      %v346 = vld [vmem:[#allocation2 + $0x98] sm:$0xff]
      %v347 = vld [vmem:[#allocation2 + $0xa0] sm:$0xff]
      %v348 = vld [vmem:[#allocation2 + $0xa8] sm:$0xff]
      %v349 = vld [vmem:[#allocation2 + $0xb0] sm:$0xff]
      %v350 = vld [vmem:[#allocation2 + $0xb8] sm:$0xff]
      %v351 = vld [vmem:[#allocation2 + $0xc0] sm:$0xff]
      %v352 = vld [vmem:[#allocation2 + $0xc8] sm:$0xff]
      %v353 = vld [vmem:[#allocation2 + $0xd0] sm:$0xff]
      %v354 = vld [vmem:[#allocation2 + $0xd8] sm:$0xff]
      %v355 = vld [vmem:[#allocation2 + $0xe0] sm:$0xff]
      %v356 = vld [vmem:[#allocation2 + $0xe8] sm:$0xff]
      %v357 = vld [vmem:[#allocation2 + $0xf0] sm:$0xff]
      %v358 = vld [vmem:[#allocation2 + $0xf8] sm:$0xff]
      %v359 = vld [vmem:[#allocation2 + $0x100] sm:$0xff]
      %v360 = vld [vmem:[#allocation2 + $0x108] sm:$0xff]
      %v361 = vld [vmem:[#allocation2 + $0x110] sm:$0xff]
      %v362 = vld [vmem:[#allocation2 + $0x118] sm:$0xff]
      %v363 = vld [vmem:[#allocation2 + $0x120] sm:$0xff]
      %v364 = vld [vmem:[#allocation2 + $0x128] sm:$0xff]
      %v365 = vld [vmem:[#allocation2 + $0x130] sm:$0xff]
      %v366 = vld [vmem:[#allocation2 + $0x138] sm:$0xff]
      %v367 = vld [vmem:[#allocation2 + $0x140] sm:$0xff]
      %v368 = vld [vmem:[#allocation2 + $0x148] sm:$0xff]
      %v369 = vld [vmem:[#allocation2 + $0x150] sm:$0xff]
      %v370 = vld [vmem:[#allocation2 + $0x158] sm:$0xff]
      %v371 = vld [vmem:[#allocation2 + $0x160] sm:$0xff]
      %v372 = vld [vmem:[#allocation2 + $0x168] sm:$0xff]
      %v373 = vld [vmem:[#allocation2 + $0x170] sm:$0xff]
      %v374 = vld [vmem:[#allocation2 + $0x178] sm:$0xff]
      %v375 = vld [vmem:[#allocation2 + $0x180] sm:$0xff]
      %v376 = vld [vmem:[#allocation2 + $0x188] sm:$0xff]
      %v377 = vld [vmem:[#allocation2 + $0x190] sm:$0xff]
      %v378 = vld [vmem:[#allocation2 + $0x198] sm:$0xff]
      %v379 = vld [vmem:[#allocation2 + $0x1a0] sm:$0xff]
      %v380 = vld [vmem:[#allocation2 + $0x1a8] sm:$0xff]
      %v381 = vld [vmem:[#allocation2 + $0x1b0] sm:$0xff]
      %v382 = vld [vmem:[#allocation2 + $0x1b8] sm:$0xff]
      %v383 = vld [vmem:[#allocation2 + $0x1c0] sm:$0xff]
      %v384 = vld [vmem:[#allocation2 + $0x1c8] sm:$0xff]
      %v385 = vld [vmem:[#allocation2 + $0x1d0] sm:$0xff]
      %v386 = vld [vmem:[#allocation2 + $0x1d8] sm:$0xff]
      %v387 = vld [vmem:[#allocation2 + $0x1e0] sm:$0xff]
      %v388 = vld [vmem:[#allocation2 + $0x1e8] sm:$0xff]
      %v389 = vld [vmem:[#allocation2 + $0x1f0] sm:$0xff]
      %v390 = vld [vmem:[#allocation2 + $0x1f8] sm:$0xff]
      %v391 = vld [vmem:[%s236] sm:$0xf]
      %v392 = vld [vmem:[%s236 + $0x4] sm:$0xf]
      %v393 = vld [vmem:[%s236 + $0x8] sm:$0xf]
      %v394 = vld [vmem:[%s236 + $0xc] sm:$0xf]
      %v395 = vld [vmem:[%s236 + $0x10] sm:$0xf]
      %v396 = vld [vmem:[%s236 + $0x14] sm:$0xf]
      %v397 = vld [vmem:[%s236 + $0x18] sm:$0xf]
      %v398 = vld [vmem:[%s236 + $0x1c] sm:$0xf]
      %v399 = vld [vmem:[%s236 + $0x20] sm:$0xf]
      %v400 = vld [vmem:[%s236 + $0x24] sm:$0xf]
      %v401 = vld [vmem:[%s236 + $0x28] sm:$0xf]
      %v402 = vld [vmem:[%s236 + $0x2c] sm:$0xf]
      %v403 = vld [vmem:[%s236 + $0x30] sm:$0xf]
      %v404 = vld [vmem:[%s236 + $0x34] sm:$0xf]
      %v405 = vld [vmem:[%s236 + $0x38] sm:$0xf]
      %v406 = vld [vmem:[%s236 + $0x3c] sm:$0xf]
      %v407 = vld [vmem:[%s236 + $0x40] sm:$0xf]
      %v408 = vld [vmem:[%s236 + $0x44] sm:$0xf]
      %v409 = vld [vmem:[%s236 + $0x48] sm:$0xf]
      %v410 = vld [vmem:[%s236 + $0x4c] sm:$0xf]
      %v411 = vld [vmem:[%s236 + $0x50] sm:$0xf]
      %v412 = vld [vmem:[%s236 + $0x54] sm:$0xf]
      %v413 = vld [vmem:[%s236 + $0x58] sm:$0xf]
      %v414 = vld [vmem:[%s236 + $0x5c] sm:$0xf]
      %v415 = vld [vmem:[%s236 + $0x60] sm:$0xf]
      %v416 = vld [vmem:[%s236 + $0x64] sm:$0xf]
      %v417 = vld [vmem:[%s236 + $0x68] sm:$0xf]
      %v418 = vld [vmem:[%s236 + $0x6c] sm:$0xf]
      %v419 = vld [vmem:[%s236 + $0x70] sm:$0xf]
      %v420 = vld [vmem:[%s236 + $0x74] sm:$0xf]
      %v421 = vld [vmem:[%s236 + $0x78] sm:$0xf]
      %v422 = vld [vmem:[%s236 + $0x7c] sm:$0xf]
      %v423 = vld [vmem:[%s236 + $0x80] sm:$0xf]
      %v424 = vld [vmem:[%s236 + $0x84] sm:$0xf]
      %v425 = vld [vmem:[%s236 + $0x88] sm:$0xf]
      %v426 = vld [vmem:[%s236 + $0x8c] sm:$0xf]
      %v427 = vld [vmem:[%s236 + $0x90] sm:$0xf]
      %v428 = vld [vmem:[%s236 + $0x94] sm:$0xf]
      %v429 = vld [vmem:[%s236 + $0x98] sm:$0xf]
      %v430 = vld [vmem:[%s236 + $0x9c] sm:$0xf]
      %v431 = vld [vmem:[%s236 + $0xa0] sm:$0xf]
      %v432 = vld [vmem:[%s236 + $0xa4] sm:$0xf]
      %v433 = vld [vmem:[%s236 + $0xa8] sm:$0xf]
      %v434 = vld [vmem:[%s236 + $0xac] sm:$0xf]
      %v435 = vld [vmem:[%s236 + $0xb0] sm:$0xf]
      %v436 = vld [vmem:[%s236 + $0xb4] sm:$0xf]
      %v437 = vld [vmem:[%s236 + $0xb8] sm:$0xf]
      %v438 = vld [vmem:[%s236 + $0xbc] sm:$0xf]
      %v439 = vld [vmem:[%s236 + $0xc0] sm:$0xf]
      %v440 = vld [vmem:[%s236 + $0xc4] sm:$0xf]
      %v441 = vld [vmem:[%s236 + $0xc8] sm:$0xf]
      %v442 = vld [vmem:[%s236 + $0xcc] sm:$0xf]
      %v443 = vld [vmem:[%s236 + $0xd0] sm:$0xf]
      %v444 = vld [vmem:[%s236 + $0xd4] sm:$0xf]
      %v445 = vld [vmem:[%s236 + $0xd8] sm:$0xf]
      %v446 = vld [vmem:[%s236 + $0xdc] sm:$0xf]
      %v447 = vld [vmem:[%s236 + $0xe0] sm:$0xf]
      %v448 = vld [vmem:[%s236 + $0xe4] sm:$0xf]
      %v449 = vld [vmem:[%s236 + $0xe8] sm:$0xf]
      %v450 = vld [vmem:[%s236 + $0xec] sm:$0xf]
      %v451 = vld [vmem:[%s236 + $0xf0] sm:$0xf]
      %v452 = vld [vmem:[%s236 + $0xf4] sm:$0xf]
      %v453 = vld [vmem:[%s236 + $0xf8] sm:$0xf]
      %v454 = vld [vmem:[%s236 + $0xfc] sm:$0xf]
      %v455 = vld [vmem:[%s245] sm:$0xf]
      %v456 = vld [vmem:[%s245 + $0x4] sm:$0xf]
      %v457 = vld [vmem:[%s245 + $0x8] sm:$0xf]
      %v458 = vld [vmem:[%s245 + $0xc] sm:$0xf]
      %v459 = vld [vmem:[%s245 + $0x10] sm:$0xf]
      %v460 = vld [vmem:[%s245 + $0x14] sm:$0xf]
      %v461 = vld [vmem:[%s245 + $0x18] sm:$0xf]
      %v462 = vld [vmem:[%s245 + $0x1c] sm:$0xf]
      %v463 = vld [vmem:[%s245 + $0x20] sm:$0xf]
      %v464 = vld [vmem:[%s245 + $0x24] sm:$0xf]
      %v465 = vld [vmem:[%s245 + $0x28] sm:$0xf]
      %v466 = vld [vmem:[%s245 + $0x2c] sm:$0xf]
      %v467 = vld [vmem:[%s245 + $0x30] sm:$0xf]
      %v468 = vld [vmem:[%s245 + $0x34] sm:$0xf]
      %v469 = vld [vmem:[%s245 + $0x38] sm:$0xf]
      %v470 = vld [vmem:[%s245 + $0x3c] sm:$0xf]
      %v535 = vunpack.c.l.b16 %v391
      %v536 = vunpack.c.l.b16 %v392
      %v537 = vunpack.c.l.b16 %v393
      %v538 = vunpack.c.l.b16 %v394
      %v539 = vunpack.c.l.b16 %v395
      %v540 = vunpack.c.l.b16 %v396
      %v541 = vunpack.c.l.b16 %v397
      %v542 = vunpack.c.l.b16 %v398
      %v543 = vunpack.c.l.b16 %v399
      %v544 = vunpack.c.l.b16 %v400
      %v545 = vunpack.c.l.b16 %v401
      %v546 = vunpack.c.l.b16 %v402
      %v547 = vunpack.c.l.b16 %v403
      %v548 = vunpack.c.l.b16 %v404
      %v549 = vunpack.c.l.b16 %v405
      %v550 = vunpack.c.l.b16 %v406
      %v551 = vunpack.c.l.b16 %v407
      %v552 = vunpack.c.l.b16 %v408
      %v553 = vunpack.c.l.b16 %v409
      %v554 = vunpack.c.l.b16 %v410
      %v555 = vunpack.c.l.b16 %v411
      %v556 = vunpack.c.l.b16 %v412
      %v557 = vunpack.c.l.b16 %v413
      %v558 = vunpack.c.l.b16 %v414
      %v559 = vunpack.c.l.b16 %v415
      %v560 = vunpack.c.l.b16 %v416
      %v561 = vunpack.c.l.b16 %v417
      %v562 = vunpack.c.l.b16 %v418
      %v563 = vunpack.c.l.b16 %v419
      %v564 = vunpack.c.l.b16 %v420
      %v565 = vunpack.c.l.b16 %v421
      %v566 = vunpack.c.l.b16 %v422
      %v567 = vunpack.c.l.b16 %v423
      %v568 = vunpack.c.l.b16 %v424
      %v569 = vunpack.c.l.b16 %v425
      %v570 = vunpack.c.l.b16 %v426
      %v571 = vunpack.c.l.b16 %v427
      %v572 = vunpack.c.l.b16 %v428
      %v573 = vunpack.c.l.b16 %v429
      %v574 = vunpack.c.l.b16 %v430
      %v575 = vunpack.c.l.b16 %v431
      %v576 = vunpack.c.l.b16 %v432
      %v577 = vunpack.c.l.b16 %v433
      %v578 = vunpack.c.l.b16 %v434
      %v579 = vunpack.c.l.b16 %v435
      %v580 = vunpack.c.l.b16 %v436
      %v581 = vunpack.c.l.b16 %v437
      %v582 = vunpack.c.l.b16 %v438
      %v583 = vunpack.c.l.b16 %v439
      %v584 = vunpack.c.l.b16 %v440
      %v585 = vunpack.c.l.b16 %v441
      %v586 = vunpack.c.l.b16 %v442
      %v587 = vunpack.c.l.b16 %v443
      %v588 = vunpack.c.l.b16 %v444
      %v589 = vunpack.c.l.b16 %v445
      %v590 = vunpack.c.l.b16 %v446
      %v591 = vunpack.c.l.b16 %v447
      %v592 = vunpack.c.l.b16 %v448
      %v593 = vunpack.c.l.b16 %v449
      %v594 = vunpack.c.l.b16 %v450
      %v595 = vunpack.c.l.b16 %v451
      %v596 = vunpack.c.l.b16 %v452
      %v597 = vunpack.c.l.b16 %v453
      %v598 = vunpack.c.l.b16 %v454
      %v599 = vpack.c.b16 %v536, %v535
      %v600 = vpack.c.b16 %v538, %v537
      %v601 = vpack.c.b16 %v540, %v539
      %v602 = vpack.c.b16 %v542, %v541
      %v603 = vpack.c.b16 %v544, %v543
      %v604 = vpack.c.b16 %v546, %v545
      %v605 = vpack.c.b16 %v548, %v547
      %v606 = vpack.c.b16 %v550, %v549
      %v607 = vpack.c.b16 %v552, %v551
      %v608 = vpack.c.b16 %v554, %v553
      %v609 = vpack.c.b16 %v556, %v555
      %v610 = vpack.c.b16 %v558, %v557
      %v611 = vpack.c.b16 %v560, %v559
      %v612 = vpack.c.b16 %v562, %v561
      %v613 = vpack.c.b16 %v564, %v563
      %v614 = vpack.c.b16 %v566, %v565
      %v615 = vpack.c.b16 %v568, %v567
      %v616 = vpack.c.b16 %v570, %v569
      %v617 = vpack.c.b16 %v572, %v571
      %v618 = vpack.c.b16 %v574, %v573
      %v619 = vpack.c.b16 %v576, %v575
      %v620 = vpack.c.b16 %v578, %v577
      %v621 = vpack.c.b16 %v580, %v579
      %v622 = vpack.c.b16 %v582, %v581
      %v623 = vpack.c.b16 %v584, %v583
      %v624 = vpack.c.b16 %v586, %v585
      %v625 = vpack.c.b16 %v588, %v587
      %v626 = vpack.c.b16 %v590, %v589
      %v627 = vpack.c.b16 %v592, %v591
      %v628 = vpack.c.b16 %v594, %v593
      %v629 = vpack.c.b16 %v596, %v595
      %v630 = vpack.c.b16 %v598, %v597
      %v679 = vunpack.c.l.b16 %v455
      %v680 = vunpack.c.l.b16 %v456
      %v681 = vunpack.c.l.b16 %v457
      %v682 = vunpack.c.l.b16 %v458
      %v683 = vunpack.c.l.b16 %v459
      %v684 = vunpack.c.l.b16 %v460
      %v685 = vunpack.c.l.b16 %v461
      %v686 = vunpack.c.l.b16 %v462
      %v687 = vunpack.c.l.b16 %v463
      %v688 = vunpack.c.l.b16 %v464
      %v689 = vunpack.c.l.b16 %v465
      %v690 = vunpack.c.l.b16 %v466
      %v691 = vunpack.c.l.b16 %v467
      %v692 = vunpack.c.l.b16 %v468
      %v693 = vunpack.c.l.b16 %v469
      %v694 = vunpack.c.l.b16 %v470
      %v695 = vpack.c.b16 %v680, %v679
      %v696 = vpack.c.b16 %v682, %v681
      %v697 = vpack.c.b16 %v684, %v683
      %v698 = vpack.c.b16 %v686, %v685
      %v699 = vpack.c.b16 %v688, %v687
      %v700 = vpack.c.b16 %v690, %v689
      %v701 = vpack.c.b16 %v692, %v691
      %v702 = vpack.c.b16 %v694, %v693
      %711 = vmatpush.bf16.msra.mxu0 %v702
      %712 = vmatpush.bf16.msra.mxu0 %v701
      %713 = vmatpush.bf16.msra.mxu0 %v700
      %714 = vmatpush.bf16.msra.mxu0 %v699
      %715 = vmatpush.bf16.msra.mxu0 %v698
      %716 = vmatpush.bf16.msra.mxu0 %v697
      %717 = vmatpush.bf16.msra.mxu0 %v696
      %718 = vmatpush.bf16.msra.mxu0 %v695
      %719 = vmatmul.bf16.gmra.mxu0 %v599
      %v720 = vpop.f32.mrf.mxu0
      %v721 = vadd.f32 0.0, %v720
      %v722 = vpop.f32.mrf.mxu0
      %v723 = vadd.f32 0.0, %v722
      %724 = vmatmul.bf16.gmra.mxu0 %v600
      %v725 = vpop.f32.mrf.mxu0
      %v726 = vadd.f32 0.0, %v725
      %v727 = vpop.f32.mrf.mxu0
      %v728 = vadd.f32 0.0, %v727
      %729 = vmatmul.bf16.gmra.mxu0 %v601
      %v730 = vpop.f32.mrf.mxu0
      %v731 = vadd.f32 0.0, %v730
      %v732 = vpop.f32.mrf.mxu0
      %v733 = vadd.f32 0.0, %v732
      %734 = vmatmul.bf16.gmra.mxu0 %v602
      %v735 = vpop.f32.mrf.mxu0
      %v736 = vadd.f32 0.0, %v735
      %v737 = vpop.f32.mrf.mxu0
      %v738 = vadd.f32 0.0, %v737
      %739 = vmatmul.bf16.gmra.mxu0 %v603
      %v740 = vpop.f32.mrf.mxu0
      %v741 = vadd.f32 0.0, %v740
      %v742 = vpop.f32.mrf.mxu0
      %v743 = vadd.f32 0.0, %v742
      %744 = vmatmul.bf16.gmra.mxu0 %v604
      %v745 = vpop.f32.mrf.mxu0
      %v746 = vadd.f32 0.0, %v745
      %v747 = vpop.f32.mrf.mxu0
      %v748 = vadd.f32 0.0, %v747
      %749 = vmatmul.bf16.gmra.mxu0 %v605
      %v750 = vpop.f32.mrf.mxu0
      %v751 = vadd.f32 0.0, %v750
      %v752 = vpop.f32.mrf.mxu0
      %v753 = vadd.f32 0.0, %v752
      %754 = vmatmul.bf16.gmra.mxu0 %v606
      %v755 = vpop.f32.mrf.mxu0
      %v756 = vadd.f32 0.0, %v755
      %v757 = vpop.f32.mrf.mxu0
      %v758 = vadd.f32 0.0, %v757
      %759 = vmatmul.bf16.gmra.mxu0 %v607
      %v760 = vpop.f32.mrf.mxu0
      %v761 = vadd.f32 0.0, %v760
      %v762 = vpop.f32.mrf.mxu0
      %v763 = vadd.f32 0.0, %v762
      %764 = vmatmul.bf16.gmra.mxu0 %v608
      %v765 = vpop.f32.mrf.mxu0
      %v766 = vadd.f32 0.0, %v765
      %v767 = vpop.f32.mrf.mxu0
      %v768 = vadd.f32 0.0, %v767
      %769 = vmatmul.bf16.gmra.mxu0 %v609
      %v770 = vpop.f32.mrf.mxu0
      %v771 = vadd.f32 0.0, %v770
      %v772 = vpop.f32.mrf.mxu0
      %v773 = vadd.f32 0.0, %v772
      %774 = vmatmul.bf16.gmra.mxu0 %v610
      %v775 = vpop.f32.mrf.mxu0
      %v776 = vadd.f32 0.0, %v775
      %v777 = vpop.f32.mrf.mxu0
      %v778 = vadd.f32 0.0, %v777
      %779 = vmatmul.bf16.gmra.mxu0 %v611
      %v780 = vpop.f32.mrf.mxu0
      %v781 = vadd.f32 0.0, %v780
      %v782 = vpop.f32.mrf.mxu0
      %v783 = vadd.f32 0.0, %v782
      %784 = vmatmul.bf16.gmra.mxu0 %v612
      %v785 = vpop.f32.mrf.mxu0
      %v786 = vadd.f32 0.0, %v785
      %v787 = vpop.f32.mrf.mxu0
      %v788 = vadd.f32 0.0, %v787
      %789 = vmatmul.bf16.gmra.mxu0 %v613
      %v790 = vpop.f32.mrf.mxu0
      %v791 = vadd.f32 0.0, %v790
      %v792 = vpop.f32.mrf.mxu0
      %v793 = vadd.f32 0.0, %v792
      %794 = vmatmul.bf16.gmra.mxu0 %v614
      %v795 = vpop.f32.mrf.mxu0
      %v796 = vadd.f32 0.0, %v795
      %v797 = vpop.f32.mrf.mxu0
      %v798 = vadd.f32 0.0, %v797
      %799 = vmatmul.bf16.gmra.mxu0 %v615
      %v800 = vpop.f32.mrf.mxu0
      %v801 = vadd.f32 0.0, %v800
      %v802 = vpop.f32.mrf.mxu0
      %v803 = vadd.f32 0.0, %v802
      %804 = vmatmul.bf16.gmra.mxu0 %v616
      %v805 = vpop.f32.mrf.mxu0
      %v806 = vadd.f32 0.0, %v805
      %v807 = vpop.f32.mrf.mxu0
      %v808 = vadd.f32 0.0, %v807
      %809 = vmatmul.bf16.gmra.mxu0 %v617
      %v810 = vpop.f32.mrf.mxu0
      %v811 = vadd.f32 0.0, %v810
      %v812 = vpop.f32.mrf.mxu0
      %v813 = vadd.f32 0.0, %v812
      %814 = vmatmul.bf16.gmra.mxu0 %v618
      %v815 = vpop.f32.mrf.mxu0
      %v816 = vadd.f32 0.0, %v815
      %v817 = vpop.f32.mrf.mxu0
      %v818 = vadd.f32 0.0, %v817
      %819 = vmatmul.bf16.gmra.mxu0 %v619
      %v820 = vpop.f32.mrf.mxu0
      %v821 = vadd.f32 0.0, %v820
      %v822 = vpop.f32.mrf.mxu0
      %v823 = vadd.f32 0.0, %v822
      %824 = vmatmul.bf16.gmra.mxu0 %v620
      %v825 = vpop.f32.mrf.mxu0
      %v826 = vadd.f32 0.0, %v825
      %v827 = vpop.f32.mrf.mxu0
      %v828 = vadd.f32 0.0, %v827
      %829 = vmatmul.bf16.gmra.mxu0 %v621
      %v830 = vpop.f32.mrf.mxu0
      %v831 = vadd.f32 0.0, %v830
      %v832 = vpop.f32.mrf.mxu0
      %v833 = vadd.f32 0.0, %v832
      %834 = vmatmul.bf16.gmra.mxu0 %v622
      %v835 = vpop.f32.mrf.mxu0
      %v836 = vadd.f32 0.0, %v835
      %v837 = vpop.f32.mrf.mxu0
      %v838 = vadd.f32 0.0, %v837
      %839 = vmatmul.bf16.gmra.mxu0 %v623
      %v840 = vpop.f32.mrf.mxu0
      %v841 = vadd.f32 0.0, %v840
      %v842 = vpop.f32.mrf.mxu0
      %v843 = vadd.f32 0.0, %v842
      %844 = vmatmul.bf16.gmra.mxu0 %v624
      %v845 = vpop.f32.mrf.mxu0
      %v846 = vadd.f32 0.0, %v845
      %v847 = vpop.f32.mrf.mxu0
      %v848 = vadd.f32 0.0, %v847
      %849 = vmatmul.bf16.gmra.mxu0 %v625
      %v850 = vpop.f32.mrf.mxu0
      %v851 = vadd.f32 0.0, %v850
      %v852 = vpop.f32.mrf.mxu0
      %v853 = vadd.f32 0.0, %v852
      %854 = vmatmul.bf16.gmra.mxu0 %v626
      %v855 = vpop.f32.mrf.mxu0
      %v856 = vadd.f32 0.0, %v855
      %v857 = vpop.f32.mrf.mxu0
      %v858 = vadd.f32 0.0, %v857
      %859 = vmatmul.bf16.gmra.mxu0 %v627
      %v860 = vpop.f32.mrf.mxu0
      %v861 = vadd.f32 0.0, %v860
      %v862 = vpop.f32.mrf.mxu0
      %v863 = vadd.f32 0.0, %v862
      %864 = vmatmul.bf16.gmra.mxu0 %v628
      %v865 = vpop.f32.mrf.mxu0
      %v866 = vadd.f32 0.0, %v865
      %v867 = vpop.f32.mrf.mxu0
      %v868 = vadd.f32 0.0, %v867
      %869 = vmatmul.bf16.gmra.mxu0 %v629
      %v870 = vpop.f32.mrf.mxu0
      %v871 = vadd.f32 0.0, %v870
      %v872 = vpop.f32.mrf.mxu0
      %v873 = vadd.f32 0.0, %v872
      %874 = vmatmul.bf16.gmra.mxu0 %v630
      %v875 = vpop.f32.mrf.mxu0
      %v876 = vadd.f32 0.0, %v875
      %v877 = vpop.f32.mrf.mxu0
      %v878 = vadd.f32 0.0, %v877
      %879 = vdwg.mxu0
      %v880 = vadd.f32 %v327, %v721
      %v881 = vadd.f32 %v328, %v723
      %v882 = vadd.f32 %v329, %v726
      %v883 = vadd.f32 %v330, %v728
      %v884 = vadd.f32 %v331, %v731
      %v885 = vadd.f32 %v332, %v733
      %v886 = vadd.f32 %v333, %v736
      %v887 = vadd.f32 %v334, %v738
      %v888 = vadd.f32 %v335, %v741
      %v889 = vadd.f32 %v336, %v743
      %v890 = vadd.f32 %v337, %v746
      %v891 = vadd.f32 %v338, %v748
      %v892 = vadd.f32 %v339, %v751
      %v893 = vadd.f32 %v340, %v753
      %v894 = vadd.f32 %v341, %v756
      %v895 = vadd.f32 %v342, %v758
      %v896 = vadd.f32 %v343, %v761
      %v897 = vadd.f32 %v344, %v763
      %v898 = vadd.f32 %v345, %v766
      %v899 = vadd.f32 %v346, %v768
      %v900 = vadd.f32 %v347, %v771
      %v901 = vadd.f32 %v348, %v773
      %v902 = vadd.f32 %v349, %v776
      %v903 = vadd.f32 %v350, %v778
      %v904 = vadd.f32 %v351, %v781
      %v905 = vadd.f32 %v352, %v783
      %v906 = vadd.f32 %v353, %v786
      %v907 = vadd.f32 %v354, %v788
      %v908 = vadd.f32 %v355, %v791
      %v909 = vadd.f32 %v356, %v793
      %v910 = vadd.f32 %v357, %v796
      %v911 = vadd.f32 %v358, %v798
      %v912 = vadd.f32 %v359, %v801
      %v913 = vadd.f32 %v360, %v803
      %v914 = vadd.f32 %v361, %v806
      %v915 = vadd.f32 %v362, %v808
      %v916 = vadd.f32 %v363, %v811
      %v917 = vadd.f32 %v364, %v813
      %v918 = vadd.f32 %v365, %v816
      %v919 = vadd.f32 %v366, %v818
      %v920 = vadd.f32 %v367, %v821
      %v921 = vadd.f32 %v368, %v823
      %v922 = vadd.f32 %v369, %v826
      %v923 = vadd.f32 %v370, %v828
      %v924 = vadd.f32 %v371, %v831
      %v925 = vadd.f32 %v372, %v833
      %v926 = vadd.f32 %v373, %v836
      %v927 = vadd.f32 %v374, %v838
      %v928 = vadd.f32 %v375, %v841
      %v929 = vadd.f32 %v376, %v843
      %v930 = vadd.f32 %v377, %v846
      %v931 = vadd.f32 %v378, %v848
      %v932 = vadd.f32 %v379, %v851
      %v933 = vadd.f32 %v380, %v853
      %v934 = vadd.f32 %v381, %v856
      %v935 = vadd.f32 %v382, %v858
      %v936 = vadd.f32 %v383, %v861
      %v937 = vadd.f32 %v384, %v863
      %v938 = vadd.f32 %v385, %v866
      %v939 = vadd.f32 %v386, %v868
      %v940 = vadd.f32 %v387, %v871
      %v941 = vadd.f32 %v388, %v873
      %v942 = vadd.f32 %v389, %v876
      %v943 = vadd.f32 %v390, %v878
      %944 = vst [vmem:[#allocation2] sm:$0xff] %v880
      %945 = vst [vmem:[#allocation2 + $0x8] sm:$0xff] %v881
      %946 = vst [vmem:[#allocation2 + $0x10] sm:$0xff] %v882
      %947 = vst [vmem:[#allocation2 + $0x18] sm:$0xff] %v883
      %948 = vst [vmem:[#allocation2 + $0x20] sm:$0xff] %v884
      %949 = vst [vmem:[#allocation2 + $0x28] sm:$0xff] %v885
      %950 = vst [vmem:[#allocation2 + $0x30] sm:$0xff] %v886
      %951 = vst [vmem:[#allocation2 + $0x38] sm:$0xff] %v887
      %952 = vst [vmem:[#allocation2 + $0x40] sm:$0xff] %v888
      %953 = vst [vmem:[#allocation2 + $0x48] sm:$0xff] %v889
      %954 = vst [vmem:[#allocation2 + $0x50] sm:$0xff] %v890
      %955 = vst [vmem:[#allocation2 + $0x58] sm:$0xff] %v891
      %956 = vst [vmem:[#allocation2 + $0x60] sm:$0xff] %v892
      %957 = vst [vmem:[#allocation2 + $0x68] sm:$0xff] %v893
      %958 = vst [vmem:[#allocation2 + $0x70] sm:$0xff] %v894
      %959 = vst [vmem:[#allocation2 + $0x78] sm:$0xff] %v895
      %960 = vst [vmem:[#allocation2 + $0x80] sm:$0xff] %v896
      %961 = vst [vmem:[#allocation2 + $0x88] sm:$0xff] %v897
      %962 = vst [vmem:[#allocation2 + $0x90] sm:$0xff] %v898
      %963 = vst [vmem:[#allocation2 + $0x98] sm:$0xff] %v899
      %964 = vst [vmem:[#allocation2 + $0xa0] sm:$0xff] %v900
      %965 = vst [vmem:[#allocation2 + $0xa8] sm:$0xff] %v901
      %966 = vst [vmem:[#allocation2 + $0xb0] sm:$0xff] %v902
      %967 = vst [vmem:[#allocation2 + $0xb8] sm:$0xff] %v903
      %968 = vst [vmem:[#allocation2 + $0xc0] sm:$0xff] %v904
      %969 = vst [vmem:[#allocation2 + $0xc8] sm:$0xff] %v905
      %970 = vst [vmem:[#allocation2 + $0xd0] sm:$0xff] %v906
      %971 = vst [vmem:[#allocation2 + $0xd8] sm:$0xff] %v907
      %972 = vst [vmem:[#allocation2 + $0xe0] sm:$0xff] %v908
      %973 = vst [vmem:[#allocation2 + $0xe8] sm:$0xff] %v909
      %974 = vst [vmem:[#allocation2 + $0xf0] sm:$0xff] %v910
      %975 = vst [vmem:[#allocation2 + $0xf8] sm:$0xff] %v911
      %976 = vst [vmem:[#allocation2 + $0x100] sm:$0xff] %v912
      %977 = vst [vmem:[#allocation2 + $0x108] sm:$0xff] %v913
      %978 = vst [vmem:[#allocation2 + $0x110] sm:$0xff] %v914
      %979 = vst [vmem:[#allocation2 + $0x118] sm:$0xff] %v915
      %980 = vst [vmem:[#allocation2 + $0x120] sm:$0xff] %v916
      %981 = vst [vmem:[#allocation2 + $0x128] sm:$0xff] %v917
      %982 = vst [vmem:[#allocation2 + $0x130] sm:$0xff] %v918
      %983 = vst [vmem:[#allocation2 + $0x138] sm:$0xff] %v919
      %984 = vst [vmem:[#allocation2 + $0x140] sm:$0xff] %v920
      %985 = vst [vmem:[#allocation2 + $0x148] sm:$0xff] %v921
      %986 = vst [vmem:[#allocation2 + $0x150] sm:$0xff] %v922
      %987 = vst [vmem:[#allocation2 + $0x158] sm:$0xff] %v923
      %988 = vst [vmem:[#allocation2 + $0x160] sm:$0xff] %v924
      %989 = vst [vmem:[#allocation2 + $0x168] sm:$0xff] %v925
      %990 = vst [vmem:[#allocation2 + $0x170] sm:$0xff] %v926
      %991 = vst [vmem:[#allocation2 + $0x178] sm:$0xff] %v927
      %992 = vst [vmem:[#allocation2 + $0x180] sm:$0xff] %v928
      %993 = vst [vmem:[#allocation2 + $0x188] sm:$0xff] %v929
      %994 = vst [vmem:[#allocation2 + $0x190] sm:$0xff] %v930
      %995 = vst [vmem:[#allocation2 + $0x198] sm:$0xff] %v931
      %996 = vst [vmem:[#allocation2 + $0x1a0] sm:$0xff] %v932
      %997 = vst [vmem:[#allocation2 + $0x1a8] sm:$0xff] %v933
      %998 = vst [vmem:[#allocation2 + $0x1b0] sm:$0xff] %v934
      %999 = vst [vmem:[#allocation2 + $0x1b8] sm:$0xff] %v935
      %1000 = vst [vmem:[#allocation2 + $0x1c0] sm:$0xff] %v936
      %1001 = vst [vmem:[#allocation2 + $0x1c8] sm:$0xff] %v937
      %1002 = vst [vmem:[#allocation2 + $0x1d0] sm:$0xff] %v938
      %1003 = vst [vmem:[#allocation2 + $0x1d8] sm:$0xff] %v939
      %1004 = vst [vmem:[#allocation2 + $0x1e0] sm:$0xff] %v940
      %1005 = vst [vmem:[#allocation2 + $0x1e8] sm:$0xff] %v941
      %1006 = vst [vmem:[#allocation2 + $0x1f0] sm:$0xff] %v942
      %1007 = vst [vmem:[#allocation2 + $0x1f8] sm:$0xff] %v943
      // Predicated region
      $region37: #{conv2d.1} parent=31 // pred_check
        %p1008 = pneg %p259
      $region38: #{conv2d.1} parent=31 // pred_check_branch
        %1010 = sbr.rel (%p1008) target = $region40
      $region39: #{conv2d.1} parent=31 // pred_region
        %v1011 = vld [vmem:[#allocation2] sm:$0xff]
        %v1012 = vld [vmem:[#allocation2 + $0x8] sm:$0xff]
        %v1013 = vld [vmem:[#allocation2 + $0x10] sm:$0xff]
        %v1014 = vld [vmem:[#allocation2 + $0x18] sm:$0xff]
        %v1015 = vld [vmem:[#allocation2 + $0x20] sm:$0xff]
        %v1016 = vld [vmem:[#allocation2 + $0x28] sm:$0xff]
        %v1017 = vld [vmem:[#allocation2 + $0x30] sm:$0xff]
        %v1018 = vld [vmem:[#allocation2 + $0x38] sm:$0xff]
        %v1019 = vld [vmem:[#allocation2 + $0x40] sm:$0xff]
        %v1020 = vld [vmem:[#allocation2 + $0x48] sm:$0xff]
        %v1021 = vld [vmem:[#allocation2 + $0x50] sm:$0xff]
        %v1022 = vld [vmem:[#allocation2 + $0x58] sm:$0xff]
        %v1023 = vld [vmem:[#allocation2 + $0x60] sm:$0xff]
        %v1024 = vld [vmem:[#allocation2 + $0x68] sm:$0xff]
        %v1025 = vld [vmem:[#allocation2 + $0x70] sm:$0xff]
        %v1026 = vld [vmem:[#allocation2 + $0x78] sm:$0xff]
        %v1027 = vld [vmem:[#allocation2 + $0x80] sm:$0xff]
        %v1028 = vld [vmem:[#allocation2 + $0x88] sm:$0xff]
        %v1029 = vld [vmem:[#allocation2 + $0x90] sm:$0xff]
        %v1030 = vld [vmem:[#allocation2 + $0x98] sm:$0xff]
        %v1031 = vld [vmem:[#allocation2 + $0xa0] sm:$0xff]
        %v1032 = vld [vmem:[#allocation2 + $0xa8] sm:$0xff]
        %v1033 = vld [vmem:[#allocation2 + $0xb0] sm:$0xff]
        %v1034 = vld [vmem:[#allocation2 + $0xb8] sm:$0xff]
        %v1035 = vld [vmem:[#allocation2 + $0xc0] sm:$0xff]
        %v1036 = vld [vmem:[#allocation2 + $0xc8] sm:$0xff]
        %v1037 = vld [vmem:[#allocation2 + $0xd0] sm:$0xff]
        %v1038 = vld [vmem:[#allocation2 + $0xd8] sm:$0xff]
        %v1039 = vld [vmem:[#allocation2 + $0xe0] sm:$0xff]
        %v1040 = vld [vmem:[#allocation2 + $0xe8] sm:$0xff]
        %v1041 = vld [vmem:[#allocation2 + $0xf0] sm:$0xff]
        %v1042 = vld [vmem:[#allocation2 + $0xf8] sm:$0xff]
        %v1043 = vld [vmem:[#allocation2 + $0x100] sm:$0xff]
        %v1044 = vld [vmem:[#allocation2 + $0x108] sm:$0xff]
        %v1045 = vld [vmem:[#allocation2 + $0x110] sm:$0xff]
        %v1046 = vld [vmem:[#allocation2 + $0x118] sm:$0xff]
        %v1047 = vld [vmem:[#allocation2 + $0x120] sm:$0xff]
        %v1048 = vld [vmem:[#allocation2 + $0x128] sm:$0xff]
        %v1049 = vld [vmem:[#allocation2 + $0x130] sm:$0xff]
        %v1050 = vld [vmem:[#allocation2 + $0x138] sm:$0xff]
        %v1051 = vld [vmem:[#allocation2 + $0x140] sm:$0xff]
        %v1052 = vld [vmem:[#allocation2 + $0x148] sm:$0xff]
        %v1053 = vld [vmem:[#allocation2 + $0x150] sm:$0xff]
        %v1054 = vld [vmem:[#allocation2 + $0x158] sm:$0xff]
        %v1055 = vld [vmem:[#allocation2 + $0x160] sm:$0xff]
        %v1056 = vld [vmem:[#allocation2 + $0x168] sm:$0xff]
        %v1057 = vld [vmem:[#allocation2 + $0x170] sm:$0xff]
        %v1058 = vld [vmem:[#allocation2 + $0x178] sm:$0xff]
        %v1059 = vld [vmem:[#allocation2 + $0x180] sm:$0xff]
        %v1060 = vld [vmem:[#allocation2 + $0x188] sm:$0xff]
        %v1061 = vld [vmem:[#allocation2 + $0x190] sm:$0xff]
        %v1062 = vld [vmem:[#allocation2 + $0x198] sm:$0xff]
        %v1063 = vld [vmem:[#allocation2 + $0x1a0] sm:$0xff]
        %v1064 = vld [vmem:[#allocation2 + $0x1a8] sm:$0xff]
        %v1065 = vld [vmem:[#allocation2 + $0x1b0] sm:$0xff]
        %v1066 = vld [vmem:[#allocation2 + $0x1b8] sm:$0xff]
        %v1067 = vld [vmem:[#allocation2 + $0x1c0] sm:$0xff]
        %v1068 = vld [vmem:[#allocation2 + $0x1c8] sm:$0xff]
        %v1069 = vld [vmem:[#allocation2 + $0x1d0] sm:$0xff]
        %v1070 = vld [vmem:[#allocation2 + $0x1d8] sm:$0xff]
        %v1071 = vld [vmem:[#allocation2 + $0x1e0] sm:$0xff]
        %v1072 = vld [vmem:[#allocation2 + $0x1e8] sm:$0xff]
        %v1073 = vld [vmem:[#allocation2 + $0x1f0] sm:$0xff]
        %v1074 = vld [vmem:[#allocation2 + $0x1f8] sm:$0xff]
        %v1075 = vld [vmem:[%s249] sm:$0x1]
        %v1077 = vperm.slane %v1075, 0
        %v1079 = vadd.f32 %v1011, %v1077
        %v1080 = vadd.f32 %v1012, %v1077
        %v1081 = vadd.f32 %v1013, %v1077
        %v1082 = vadd.f32 %v1014, %v1077
        %v1083 = vadd.f32 %v1015, %v1077
        %v1084 = vadd.f32 %v1016, %v1077
        %v1085 = vadd.f32 %v1017, %v1077
        %v1086 = vadd.f32 %v1018, %v1077
        %v1087 = vadd.f32 %v1019, %v1077
        %v1088 = vadd.f32 %v1020, %v1077
        %v1089 = vadd.f32 %v1021, %v1077
        %v1090 = vadd.f32 %v1022, %v1077
        %v1091 = vadd.f32 %v1023, %v1077
        %v1092 = vadd.f32 %v1024, %v1077
        %v1093 = vadd.f32 %v1025, %v1077
        %v1094 = vadd.f32 %v1026, %v1077
        %v1095 = vadd.f32 %v1027, %v1077
        %v1096 = vadd.f32 %v1028, %v1077
        %v1097 = vadd.f32 %v1029, %v1077
        %v1098 = vadd.f32 %v1030, %v1077
        %v1099 = vadd.f32 %v1031, %v1077
        %v1100 = vadd.f32 %v1032, %v1077
        %v1101 = vadd.f32 %v1033, %v1077
        %v1102 = vadd.f32 %v1034, %v1077
        %v1103 = vadd.f32 %v1035, %v1077
        %v1104 = vadd.f32 %v1036, %v1077
        %v1105 = vadd.f32 %v1037, %v1077
        %v1106 = vadd.f32 %v1038, %v1077
        %v1107 = vadd.f32 %v1039, %v1077
        %v1108 = vadd.f32 %v1040, %v1077
        %v1109 = vadd.f32 %v1041, %v1077
        %v1110 = vadd.f32 %v1042, %v1077
        %v1111 = vadd.f32 %v1043, %v1077
        %v1112 = vadd.f32 %v1044, %v1077
        %v1113 = vadd.f32 %v1045, %v1077
        %v1114 = vadd.f32 %v1046, %v1077
        %v1115 = vadd.f32 %v1047, %v1077
        %v1116 = vadd.f32 %v1048, %v1077
        %v1117 = vadd.f32 %v1049, %v1077
        %v1118 = vadd.f32 %v1050, %v1077
        %v1119 = vadd.f32 %v1051, %v1077
        %v1120 = vadd.f32 %v1052, %v1077
        %v1121 = vadd.f32 %v1053, %v1077
        %v1122 = vadd.f32 %v1054, %v1077
        %v1123 = vadd.f32 %v1055, %v1077
        %v1124 = vadd.f32 %v1056, %v1077
        %v1125 = vadd.f32 %v1057, %v1077
        %v1126 = vadd.f32 %v1058, %v1077
        %v1127 = vadd.f32 %v1059, %v1077
        %v1128 = vadd.f32 %v1060, %v1077
        %v1129 = vadd.f32 %v1061, %v1077
        %v1130 = vadd.f32 %v1062, %v1077
        %v1131 = vadd.f32 %v1063, %v1077
        %v1132 = vadd.f32 %v1064, %v1077
        %v1133 = vadd.f32 %v1065, %v1077
        %v1134 = vadd.f32 %v1066, %v1077
        %v1135 = vadd.f32 %v1067, %v1077
        %v1136 = vadd.f32 %v1068, %v1077
        %v1137 = vadd.f32 %v1069, %v1077
        %v1138 = vadd.f32 %v1070, %v1077
        %v1139 = vadd.f32 %v1071, %v1077
        %v1140 = vadd.f32 %v1072, %v1077
        %v1141 = vadd.f32 %v1073, %v1077
        %v1142 = vadd.f32 %v1074, %v1077
        %v1143 = vand.u32 2147483647, %v1079
        %v1144 = vand.u32 2147483647, %v1080
        %v1145 = vand.u32 2147483647, %v1081
        %v1146 = vand.u32 2147483647, %v1082
        %v1147 = vand.u32 2147483647, %v1083
        %v1148 = vand.u32 2147483647, %v1084
        %v1149 = vand.u32 2147483647, %v1085
        %v1150 = vand.u32 2147483647, %v1086
        %v1151 = vand.u32 2147483647, %v1087
        %v1152 = vand.u32 2147483647, %v1088
        %v1153 = vand.u32 2147483647, %v1089
        %v1154 = vand.u32 2147483647, %v1090
        %v1155 = vand.u32 2147483647, %v1091
        %v1156 = vand.u32 2147483647, %v1092
        %v1157 = vand.u32 2147483647, %v1093
        %v1158 = vand.u32 2147483647, %v1094
        %v1159 = vand.u32 2147483647, %v1095
        %v1160 = vand.u32 2147483647, %v1096
        %v1161 = vand.u32 2147483647, %v1097
        %v1162 = vand.u32 2147483647, %v1098
        %v1163 = vand.u32 2147483647, %v1099
        %v1164 = vand.u32 2147483647, %v1100
        %v1165 = vand.u32 2147483647, %v1101
        %v1166 = vand.u32 2147483647, %v1102
        %v1167 = vand.u32 2147483647, %v1103
        %v1168 = vand.u32 2147483647, %v1104
        %v1169 = vand.u32 2147483647, %v1105
        %v1170 = vand.u32 2147483647, %v1106
        %v1171 = vand.u32 2147483647, %v1107
        %v1172 = vand.u32 2147483647, %v1108
        %v1173 = vand.u32 2147483647, %v1109
        %v1174 = vand.u32 2147483647, %v1110
        %v1175 = vand.u32 2147483647, %v1111
        %v1176 = vand.u32 2147483647, %v1112
        %v1177 = vand.u32 2147483647, %v1113
        %v1178 = vand.u32 2147483647, %v1114
        %v1179 = vand.u32 2147483647, %v1115
        %v1180 = vand.u32 2147483647, %v1116
        %v1181 = vand.u32 2147483647, %v1117
        %v1182 = vand.u32 2147483647, %v1118
        %v1183 = vand.u32 2147483647, %v1119
        %v1184 = vand.u32 2147483647, %v1120
        %v1185 = vand.u32 2147483647, %v1121
        %v1186 = vand.u32 2147483647, %v1122
        %v1187 = vand.u32 2147483647, %v1123
        %v1188 = vand.u32 2147483647, %v1124
        %v1189 = vand.u32 2147483647, %v1125
        %v1190 = vand.u32 2147483647, %v1126
        %v1191 = vand.u32 2147483647, %v1127
        %v1192 = vand.u32 2147483647, %v1128
        %v1193 = vand.u32 2147483647, %v1129
        %v1194 = vand.u32 2147483647, %v1130
        %v1195 = vand.u32 2147483647, %v1131
        %v1196 = vand.u32 2147483647, %v1132
        %v1197 = vand.u32 2147483647, %v1133
        %v1198 = vand.u32 2147483647, %v1134
        %v1199 = vand.u32 2147483647, %v1135
        %v1200 = vand.u32 2147483647, %v1136
        %v1201 = vand.u32 2147483647, %v1137
        %v1202 = vand.u32 2147483647, %v1138
        %v1203 = vand.u32 2147483647, %v1139
        %v1204 = vand.u32 2147483647, %v1140
        %v1205 = vand.u32 2147483647, %v1141
        %v1206 = vand.u32 2147483647, %v1142
        %v1207 = vsub.f32 0.0, %v1143
        %v1208 = vsub.f32 0.0, %v1144
        %v1209 = vsub.f32 0.0, %v1145
        %v1210 = vsub.f32 0.0, %v1146
        %v1211 = vsub.f32 0.0, %v1147
        %v1212 = vsub.f32 0.0, %v1148
        %v1213 = vsub.f32 0.0, %v1149
        %v1214 = vsub.f32 0.0, %v1150
        %v1215 = vsub.f32 0.0, %v1151
        %v1216 = vsub.f32 0.0, %v1152
        %v1217 = vsub.f32 0.0, %v1153
        %v1218 = vsub.f32 0.0, %v1154
        %v1219 = vsub.f32 0.0, %v1155
        %v1220 = vsub.f32 0.0, %v1156
        %v1221 = vsub.f32 0.0, %v1157
        %v1222 = vsub.f32 0.0, %v1158
        %v1223 = vsub.f32 0.0, %v1159
        %v1224 = vsub.f32 0.0, %v1160
        %v1225 = vsub.f32 0.0, %v1161
        %v1226 = vsub.f32 0.0, %v1162
        %v1227 = vsub.f32 0.0, %v1163
        %v1228 = vsub.f32 0.0, %v1164
        %v1229 = vsub.f32 0.0, %v1165
        %v1230 = vsub.f32 0.0, %v1166
        %v1231 = vsub.f32 0.0, %v1167
        %v1232 = vsub.f32 0.0, %v1168
        %v1233 = vsub.f32 0.0, %v1169
        %v1234 = vsub.f32 0.0, %v1170
        %v1235 = vsub.f32 0.0, %v1171
        %v1236 = vsub.f32 0.0, %v1172
        %v1237 = vsub.f32 0.0, %v1173
        %v1238 = vsub.f32 0.0, %v1174
        %v1239 = vsub.f32 0.0, %v1175
        %v1240 = vsub.f32 0.0, %v1176
        %v1241 = vsub.f32 0.0, %v1177
        %v1242 = vsub.f32 0.0, %v1178
        %v1243 = vsub.f32 0.0, %v1179
        %v1244 = vsub.f32 0.0, %v1180
        %v1245 = vsub.f32 0.0, %v1181
        %v1246 = vsub.f32 0.0, %v1182
        %v1247 = vsub.f32 0.0, %v1183
        %v1248 = vsub.f32 0.0, %v1184
        %v1249 = vsub.f32 0.0, %v1185
        %v1250 = vsub.f32 0.0, %v1186
        %v1251 = vsub.f32 0.0, %v1187
        %v1252 = vsub.f32 0.0, %v1188
        %v1253 = vsub.f32 0.0, %v1189
        %v1254 = vsub.f32 0.0, %v1190
        %v1255 = vsub.f32 0.0, %v1191
        %v1256 = vsub.f32 0.0, %v1192
        %v1257 = vsub.f32 0.0, %v1193
        %v1258 = vsub.f32 0.0, %v1194
        %v1259 = vsub.f32 0.0, %v1195
        %v1260 = vsub.f32 0.0, %v1196
        %v1261 = vsub.f32 0.0, %v1197
        %v1262 = vsub.f32 0.0, %v1198
        %v1263 = vsub.f32 0.0, %v1199
        %v1264 = vsub.f32 0.0, %v1200
        %v1265 = vsub.f32 0.0, %v1201
        %v1266 = vsub.f32 0.0, %v1202
        %v1267 = vsub.f32 0.0, %v1203
        %v1268 = vsub.f32 0.0, %v1204
        %v1269 = vsub.f32 0.0, %v1205
        %v1270 = vsub.f32 0.0, %v1206
        %v1271 = vmul.f32 %v1207, 1.442695
        %v1272 = vpow.pop %v1271
        %v1273 = vmul.f32 %v1208, 1.442695
        %v1274 = vpow.pop %v1273
        %v1275 = vmul.f32 %v1209, 1.442695
        %v1276 = vpow.pop %v1275
        %v1277 = vmul.f32 %v1210, 1.442695
        %v1278 = vpow.pop %v1277
        %v1279 = vmul.f32 %v1211, 1.442695
        %v1280 = vpow.pop %v1279
        %v1281 = vmul.f32 %v1212, 1.442695
        %v1282 = vpow.pop %v1281
        %v1283 = vmul.f32 %v1213, 1.442695
        %v1284 = vpow.pop %v1283
        %v1285 = vmul.f32 %v1214, 1.442695
        %v1286 = vpow.pop %v1285
        %v1287 = vmul.f32 %v1215, 1.442695
        %v1288 = vpow.pop %v1287
        %v1289 = vmul.f32 %v1216, 1.442695
        %v1290 = vpow.pop %v1289
        %v1291 = vmul.f32 %v1217, 1.442695
        %v1292 = vpow.pop %v1291
        %v1293 = vmul.f32 %v1218, 1.442695
        %v1294 = vpow.pop %v1293
        %v1295 = vmul.f32 %v1219, 1.442695
        %v1296 = vpow.pop %v1295
        %v1297 = vmul.f32 %v1220, 1.442695
        %v1298 = vpow.pop %v1297
        %v1299 = vmul.f32 %v1221, 1.442695
        %v1300 = vpow.pop %v1299
        %v1301 = vmul.f32 %v1222, 1.442695
        %v1302 = vpow.pop %v1301
        %v1303 = vmul.f32 %v1223, 1.442695
        %v1304 = vpow.pop %v1303
        %v1305 = vmul.f32 %v1224, 1.442695
        %v1306 = vpow.pop %v1305
        %v1307 = vmul.f32 %v1225, 1.442695
        %v1308 = vpow.pop %v1307
        %v1309 = vmul.f32 %v1226, 1.442695
        %v1310 = vpow.pop %v1309
        %v1311 = vmul.f32 %v1227, 1.442695
        %v1312 = vpow.pop %v1311
        %v1313 = vmul.f32 %v1228, 1.442695
        %v1314 = vpow.pop %v1313
        %v1315 = vmul.f32 %v1229, 1.442695
        %v1316 = vpow.pop %v1315
        %v1317 = vmul.f32 %v1230, 1.442695
        %v1318 = vpow.pop %v1317
        %v1319 = vmul.f32 %v1231, 1.442695
        %v1320 = vpow.pop %v1319
        %v1321 = vmul.f32 %v1232, 1.442695
        %v1322 = vpow.pop %v1321
        %v1323 = vmul.f32 %v1233, 1.442695
        %v1324 = vpow.pop %v1323
        %v1325 = vmul.f32 %v1234, 1.442695
        %v1326 = vpow.pop %v1325
        %v1327 = vmul.f32 %v1235, 1.442695
        %v1328 = vpow.pop %v1327
        %v1329 = vmul.f32 %v1236, 1.442695
        %v1330 = vpow.pop %v1329
        %v1331 = vmul.f32 %v1237, 1.442695
        %v1332 = vpow.pop %v1331
        %v1333 = vmul.f32 %v1238, 1.442695
        %v1334 = vpow.pop %v1333
        %v1335 = vmul.f32 %v1239, 1.442695
        %v1336 = vpow.pop %v1335
        %v1337 = vmul.f32 %v1240, 1.442695
        %v1338 = vpow.pop %v1337
        %v1339 = vmul.f32 %v1241, 1.442695
        %v1340 = vpow.pop %v1339
        %v1341 = vmul.f32 %v1242, 1.442695
        %v1342 = vpow.pop %v1341
        %v1343 = vmul.f32 %v1243, 1.442695
        %v1344 = vpow.pop %v1343
        %v1345 = vmul.f32 %v1244, 1.442695
        %v1346 = vpow.pop %v1345
        %v1347 = vmul.f32 %v1245, 1.442695
        %v1348 = vpow.pop %v1347
        %v1349 = vmul.f32 %v1246, 1.442695
        %v1350 = vpow.pop %v1349
        %v1351 = vmul.f32 %v1247, 1.442695
        %v1352 = vpow.pop %v1351
        %v1353 = vmul.f32 %v1248, 1.442695
        %v1354 = vpow.pop %v1353
        %v1355 = vmul.f32 %v1249, 1.442695
        %v1356 = vpow.pop %v1355
        %v1357 = vmul.f32 %v1250, 1.442695
        %v1358 = vpow.pop %v1357
        %v1359 = vmul.f32 %v1251, 1.442695
        %v1360 = vpow.pop %v1359
        %v1361 = vmul.f32 %v1252, 1.442695
        %v1362 = vpow.pop %v1361
        %v1363 = vmul.f32 %v1253, 1.442695
        %v1364 = vpow.pop %v1363
        %v1365 = vmul.f32 %v1254, 1.442695
        %v1366 = vpow.pop %v1365
        %v1367 = vmul.f32 %v1255, 1.442695
        %v1368 = vpow.pop %v1367
        %v1369 = vmul.f32 %v1256, 1.442695
        %v1370 = vpow.pop %v1369
        %v1371 = vmul.f32 %v1257, 1.442695
        %v1372 = vpow.pop %v1371
        %v1373 = vmul.f32 %v1258, 1.442695
        %v1374 = vpow.pop %v1373
        %v1375 = vmul.f32 %v1259, 1.442695
        %v1376 = vpow.pop %v1375
        %v1377 = vmul.f32 %v1260, 1.442695
        %v1378 = vpow.pop %v1377
        %v1379 = vmul.f32 %v1261, 1.442695
        %v1380 = vpow.pop %v1379
        %v1381 = vmul.f32 %v1262, 1.442695
        %v1382 = vpow.pop %v1381
        %v1383 = vmul.f32 %v1263, 1.442695
        %v1384 = vpow.pop %v1383
        %v1385 = vmul.f32 %v1264, 1.442695
        %v1386 = vpow.pop %v1385
        %v1387 = vmul.f32 %v1265, 1.442695
        %v1388 = vpow.pop %v1387
        %v1389 = vmul.f32 %v1266, 1.442695
        %v1390 = vpow.pop %v1389
        %v1391 = vmul.f32 %v1267, 1.442695
        %v1392 = vpow.pop %v1391
        %v1393 = vmul.f32 %v1268, 1.442695
        %v1394 = vpow.pop %v1393
        %v1395 = vmul.f32 %v1269, 1.442695
        %v1396 = vpow.pop %v1395
        %v1397 = vmul.f32 %v1270, 1.442695
        %v1398 = vpow.pop %v1397
        %v1399 = vadd.f32 %v1272, 1.0
        %v1400 = vadd.f32 %v1274, 1.0
        %v1401 = vadd.f32 %v1276, 1.0
        %v1402 = vadd.f32 %v1278, 1.0
        %v1403 = vadd.f32 %v1280, 1.0
        %v1404 = vadd.f32 %v1282, 1.0
        %v1405 = vadd.f32 %v1284, 1.0
        %v1406 = vadd.f32 %v1286, 1.0
        %v1407 = vadd.f32 %v1288, 1.0
        %v1408 = vadd.f32 %v1290, 1.0
        %v1409 = vadd.f32 %v1292, 1.0
        %v1410 = vadd.f32 %v1294, 1.0
        %v1411 = vadd.f32 %v1296, 1.0
        %v1412 = vadd.f32 %v1298, 1.0
        %v1413 = vadd.f32 %v1300, 1.0
        %v1414 = vadd.f32 %v1302, 1.0
        %v1415 = vadd.f32 %v1304, 1.0
        %v1416 = vadd.f32 %v1306, 1.0
        %v1417 = vadd.f32 %v1308, 1.0
        %v1418 = vadd.f32 %v1310, 1.0
        %v1419 = vadd.f32 %v1312, 1.0
        %v1420 = vadd.f32 %v1314, 1.0
        %v1421 = vadd.f32 %v1316, 1.0
        %v1422 = vadd.f32 %v1318, 1.0
        %v1423 = vadd.f32 %v1320, 1.0
        %v1424 = vadd.f32 %v1322, 1.0
        %v1425 = vadd.f32 %v1324, 1.0
        %v1426 = vadd.f32 %v1326, 1.0
        %v1427 = vadd.f32 %v1328, 1.0
        %v1428 = vadd.f32 %v1330, 1.0
        %v1429 = vadd.f32 %v1332, 1.0
        %v1430 = vadd.f32 %v1334, 1.0
        %v1431 = vadd.f32 %v1336, 1.0
        %v1432 = vadd.f32 %v1338, 1.0
        %v1433 = vadd.f32 %v1340, 1.0
        %v1434 = vadd.f32 %v1342, 1.0
        %v1435 = vadd.f32 %v1344, 1.0
        %v1436 = vadd.f32 %v1346, 1.0
        %v1437 = vadd.f32 %v1348, 1.0
        %v1438 = vadd.f32 %v1350, 1.0
        %v1439 = vadd.f32 %v1352, 1.0
        %v1440 = vadd.f32 %v1354, 1.0
        %v1441 = vadd.f32 %v1356, 1.0
        %v1442 = vadd.f32 %v1358, 1.0
        %v1443 = vadd.f32 %v1360, 1.0
        %v1444 = vadd.f32 %v1362, 1.0
        %v1445 = vadd.f32 %v1364, 1.0
        %v1446 = vadd.f32 %v1366, 1.0
        %v1447 = vadd.f32 %v1368, 1.0
        %v1448 = vadd.f32 %v1370, 1.0
        %v1449 = vadd.f32 %v1372, 1.0
        %v1450 = vadd.f32 %v1374, 1.0
        %v1451 = vadd.f32 %v1376, 1.0
        %v1452 = vadd.f32 %v1378, 1.0
        %v1453 = vadd.f32 %v1380, 1.0
        %v1454 = vadd.f32 %v1382, 1.0
        %v1455 = vadd.f32 %v1384, 1.0
        %v1456 = vadd.f32 %v1386, 1.0
        %v1457 = vadd.f32 %v1388, 1.0
        %v1458 = vadd.f32 %v1390, 1.0
        %v1459 = vadd.f32 %v1392, 1.0
        %v1460 = vadd.f32 %v1394, 1.0
        %v1461 = vadd.f32 %v1396, 1.0
        %v1462 = vadd.f32 %v1398, 1.0
        %v1463 = vrcp.pop %v1399
        %v1464 = vrcp.pop %v1400
        %v1465 = vrcp.pop %v1401
        %v1466 = vrcp.pop %v1402
        %v1467 = vrcp.pop %v1403
        %v1468 = vrcp.pop %v1404
        %v1469 = vrcp.pop %v1405
        %v1470 = vrcp.pop %v1406
        %v1471 = vrcp.pop %v1407
        %v1472 = vrcp.pop %v1408
        %v1473 = vrcp.pop %v1409
        %v1474 = vrcp.pop %v1410
        %v1475 = vrcp.pop %v1411
        %v1476 = vrcp.pop %v1412
        %v1477 = vrcp.pop %v1413
        %v1478 = vrcp.pop %v1414
        %v1479 = vrcp.pop %v1415
        %v1480 = vrcp.pop %v1416
        %v1481 = vrcp.pop %v1417
        %v1482 = vrcp.pop %v1418
        %v1483 = vrcp.pop %v1419
        %v1484 = vrcp.pop %v1420
        %v1485 = vrcp.pop %v1421
        %v1486 = vrcp.pop %v1422
        %v1487 = vrcp.pop %v1423
        %v1488 = vrcp.pop %v1424
        %v1489 = vrcp.pop %v1425
        %v1490 = vrcp.pop %v1426
        %v1491 = vrcp.pop %v1427
        %v1492 = vrcp.pop %v1428
        %v1493 = vrcp.pop %v1429
        %v1494 = vrcp.pop %v1430
        %v1495 = vrcp.pop %v1431
        %v1496 = vrcp.pop %v1432
        %v1497 = vrcp.pop %v1433
        %v1498 = vrcp.pop %v1434
        %v1499 = vrcp.pop %v1435
        %v1500 = vrcp.pop %v1436
        %v1501 = vrcp.pop %v1437
        %v1502 = vrcp.pop %v1438
        %v1503 = vrcp.pop %v1439
        %v1504 = vrcp.pop %v1440
        %v1505 = vrcp.pop %v1441
        %v1506 = vrcp.pop %v1442
        %v1507 = vrcp.pop %v1443
        %v1508 = vrcp.pop %v1444
        %v1509 = vrcp.pop %v1445
        %v1510 = vrcp.pop %v1446
        %v1511 = vrcp.pop %v1447
        %v1512 = vrcp.pop %v1448
        %v1513 = vrcp.pop %v1449
        %v1514 = vrcp.pop %v1450
        %v1515 = vrcp.pop %v1451
        %v1516 = vrcp.pop %v1452
        %v1517 = vrcp.pop %v1453
        %v1518 = vrcp.pop %v1454
        %v1519 = vrcp.pop %v1455
        %v1520 = vrcp.pop %v1456
        %v1521 = vrcp.pop %v1457
        %v1522 = vrcp.pop %v1458
        %v1523 = vrcp.pop %v1459
        %v1524 = vrcp.pop %v1460
        %v1525 = vrcp.pop %v1461
        %v1526 = vrcp.pop %v1462
        %vm1527 = vcmp.ge.f32.partialorder %v1079, 0.0
        %vm1528 = vcmp.ge.f32.partialorder %v1080, 0.0
        %vm1529 = vcmp.ge.f32.partialorder %v1081, 0.0
        %vm1530 = vcmp.ge.f32.partialorder %v1082, 0.0
        %vm1531 = vcmp.ge.f32.partialorder %v1083, 0.0
        %vm1532 = vcmp.ge.f32.partialorder %v1084, 0.0
        %vm1533 = vcmp.ge.f32.partialorder %v1085, 0.0
        %vm1534 = vcmp.ge.f32.partialorder %v1086, 0.0
        %vm1535 = vcmp.ge.f32.partialorder %v1087, 0.0
        %vm1536 = vcmp.ge.f32.partialorder %v1088, 0.0
        %vm1537 = vcmp.ge.f32.partialorder %v1089, 0.0
        %vm1538 = vcmp.ge.f32.partialorder %v1090, 0.0
        %vm1539 = vcmp.ge.f32.partialorder %v1091, 0.0
        %vm1540 = vcmp.ge.f32.partialorder %v1092, 0.0
        %vm1541 = vcmp.ge.f32.partialorder %v1093, 0.0
        %vm1542 = vcmp.ge.f32.partialorder %v1094, 0.0
        %vm1543 = vcmp.ge.f32.partialorder %v1095, 0.0
        %vm1544 = vcmp.ge.f32.partialorder %v1096, 0.0
        %vm1545 = vcmp.ge.f32.partialorder %v1097, 0.0
        %vm1546 = vcmp.ge.f32.partialorder %v1098, 0.0
        %vm1547 = vcmp.ge.f32.partialorder %v1099, 0.0
        %vm1548 = vcmp.ge.f32.partialorder %v1100, 0.0
        %vm1549 = vcmp.ge.f32.partialorder %v1101, 0.0
        %vm1550 = vcmp.ge.f32.partialorder %v1102, 0.0
        %vm1551 = vcmp.ge.f32.partialorder %v1103, 0.0
        %vm1552 = vcmp.ge.f32.partialorder %v1104, 0.0
        %vm1553 = vcmp.ge.f32.partialorder %v1105, 0.0
        %vm1554 = vcmp.ge.f32.partialorder %v1106, 0.0
        %vm1555 = vcmp.ge.f32.partialorder %v1107, 0.0
        %vm1556 = vcmp.ge.f32.partialorder %v1108, 0.0
        %vm1557 = vcmp.ge.f32.partialorder %v1109, 0.0
        %vm1558 = vcmp.ge.f32.partialorder %v1110, 0.0
        %vm1559 = vcmp.ge.f32.partialorder %v1111, 0.0
        %vm1560 = vcmp.ge.f32.partialorder %v1112, 0.0
        %vm1561 = vcmp.ge.f32.partialorder %v1113, 0.0
        %vm1562 = vcmp.ge.f32.partialorder %v1114, 0.0
        %vm1563 = vcmp.ge.f32.partialorder %v1115, 0.0
        %vm1564 = vcmp.ge.f32.partialorder %v1116, 0.0
        %vm1565 = vcmp.ge.f32.partialorder %v1117, 0.0
        %vm1566 = vcmp.ge.f32.partialorder %v1118, 0.0
        %vm1567 = vcmp.ge.f32.partialorder %v1119, 0.0
        %vm1568 = vcmp.ge.f32.partialorder %v1120, 0.0
        %vm1569 = vcmp.ge.f32.partialorder %v1121, 0.0
        %vm1570 = vcmp.ge.f32.partialorder %v1122, 0.0
        %vm1571 = vcmp.ge.f32.partialorder %v1123, 0.0
        %vm1572 = vcmp.ge.f32.partialorder %v1124, 0.0
        %vm1573 = vcmp.ge.f32.partialorder %v1125, 0.0
        %vm1574 = vcmp.ge.f32.partialorder %v1126, 0.0
        %vm1575 = vcmp.ge.f32.partialorder %v1127, 0.0
        %vm1576 = vcmp.ge.f32.partialorder %v1128, 0.0
        %vm1577 = vcmp.ge.f32.partialorder %v1129, 0.0
        %vm1578 = vcmp.ge.f32.partialorder %v1130, 0.0
        %vm1579 = vcmp.ge.f32.partialorder %v1131, 0.0
        %vm1580 = vcmp.ge.f32.partialorder %v1132, 0.0
        %vm1581 = vcmp.ge.f32.partialorder %v1133, 0.0
        %vm1582 = vcmp.ge.f32.partialorder %v1134, 0.0
        %vm1583 = vcmp.ge.f32.partialorder %v1135, 0.0
        %vm1584 = vcmp.ge.f32.partialorder %v1136, 0.0
        %vm1585 = vcmp.ge.f32.partialorder %v1137, 0.0
        %vm1586 = vcmp.ge.f32.partialorder %v1138, 0.0
        %vm1587 = vcmp.ge.f32.partialorder %v1139, 0.0
        %vm1588 = vcmp.ge.f32.partialorder %v1140, 0.0
        %vm1589 = vcmp.ge.f32.partialorder %v1141, 0.0
        %vm1590 = vcmp.ge.f32.partialorder %v1142, 0.0
        %v1591 = vmul.f32 %v1272, %v1463
        %v1592 = vmul.f32 %v1274, %v1464
        %v1593 = vmul.f32 %v1276, %v1465
        %v1594 = vmul.f32 %v1278, %v1466
        %v1595 = vmul.f32 %v1280, %v1467
        %v1596 = vmul.f32 %v1282, %v1468
        %v1597 = vmul.f32 %v1284, %v1469
        %v1598 = vmul.f32 %v1286, %v1470
        %v1599 = vmul.f32 %v1288, %v1471
        %v1600 = vmul.f32 %v1290, %v1472
        %v1601 = vmul.f32 %v1292, %v1473
        %v1602 = vmul.f32 %v1294, %v1474
        %v1603 = vmul.f32 %v1296, %v1475
        %v1604 = vmul.f32 %v1298, %v1476
        %v1605 = vmul.f32 %v1300, %v1477
        %v1606 = vmul.f32 %v1302, %v1478
        %v1607 = vmul.f32 %v1304, %v1479
        %v1608 = vmul.f32 %v1306, %v1480
        %v1609 = vmul.f32 %v1308, %v1481
        %v1610 = vmul.f32 %v1310, %v1482
        %v1611 = vmul.f32 %v1312, %v1483
        %v1612 = vmul.f32 %v1314, %v1484
        %v1613 = vmul.f32 %v1316, %v1485
        %v1614 = vmul.f32 %v1318, %v1486
        %v1615 = vmul.f32 %v1320, %v1487
        %v1616 = vmul.f32 %v1322, %v1488
        %v1617 = vmul.f32 %v1324, %v1489
        %v1618 = vmul.f32 %v1326, %v1490
        %v1619 = vmul.f32 %v1328, %v1491
        %v1620 = vmul.f32 %v1330, %v1492
        %v1621 = vmul.f32 %v1332, %v1493
        %v1622 = vmul.f32 %v1334, %v1494
        %v1623 = vmul.f32 %v1336, %v1495
        %v1624 = vmul.f32 %v1338, %v1496
        %v1625 = vmul.f32 %v1340, %v1497
        %v1626 = vmul.f32 %v1342, %v1498
        %v1627 = vmul.f32 %v1344, %v1499
        %v1628 = vmul.f32 %v1346, %v1500
        %v1629 = vmul.f32 %v1348, %v1501
        %v1630 = vmul.f32 %v1350, %v1502
        %v1631 = vmul.f32 %v1352, %v1503
        %v1632 = vmul.f32 %v1354, %v1504
        %v1633 = vmul.f32 %v1356, %v1505
        %v1634 = vmul.f32 %v1358, %v1506
        %v1635 = vmul.f32 %v1360, %v1507
        %v1636 = vmul.f32 %v1362, %v1508
        %v1637 = vmul.f32 %v1364, %v1509
        %v1638 = vmul.f32 %v1366, %v1510
        %v1639 = vmul.f32 %v1368, %v1511
        %v1640 = vmul.f32 %v1370, %v1512
        %v1641 = vmul.f32 %v1372, %v1513
        %v1642 = vmul.f32 %v1374, %v1514
        %v1643 = vmul.f32 %v1376, %v1515
        %v1644 = vmul.f32 %v1378, %v1516
        %v1645 = vmul.f32 %v1380, %v1517
        %v1646 = vmul.f32 %v1382, %v1518
        %v1647 = vmul.f32 %v1384, %v1519
        %v1648 = vmul.f32 %v1386, %v1520
        %v1649 = vmul.f32 %v1388, %v1521
        %v1650 = vmul.f32 %v1390, %v1522
        %v1651 = vmul.f32 %v1392, %v1523
        %v1652 = vmul.f32 %v1394, %v1524
        %v1653 = vmul.f32 %v1396, %v1525
        %v1654 = vmul.f32 %v1398, %v1526
        %v1655 = vsel %vm1527, %v1463, %v1591
        %v1656 = vsel %vm1528, %v1464, %v1592
        %v1657 = vsel %vm1529, %v1465, %v1593
        %v1658 = vsel %vm1530, %v1466, %v1594
        %v1659 = vsel %vm1531, %v1467, %v1595
        %v1660 = vsel %vm1532, %v1468, %v1596
        %v1661 = vsel %vm1533, %v1469, %v1597
        %v1662 = vsel %vm1534, %v1470, %v1598
        %v1663 = vsel %vm1535, %v1471, %v1599
        %v1664 = vsel %vm1536, %v1472, %v1600
        %v1665 = vsel %vm1537, %v1473, %v1601
        %v1666 = vsel %vm1538, %v1474, %v1602
        %v1667 = vsel %vm1539, %v1475, %v1603
        %v1668 = vsel %vm1540, %v1476, %v1604
        %v1669 = vsel %vm1541, %v1477, %v1605
        %v1670 = vsel %vm1542, %v1478, %v1606
        %v1671 = vsel %vm1543, %v1479, %v1607
        %v1672 = vsel %vm1544, %v1480, %v1608
        %v1673 = vsel %vm1545, %v1481, %v1609
        %v1674 = vsel %vm1546, %v1482, %v1610
        %v1675 = vsel %vm1547, %v1483, %v1611
        %v1676 = vsel %vm1548, %v1484, %v1612
        %v1677 = vsel %vm1549, %v1485, %v1613
        %v1678 = vsel %vm1550, %v1486, %v1614
        %v1679 = vsel %vm1551, %v1487, %v1615
        %v1680 = vsel %vm1552, %v1488, %v1616
        %v1681 = vsel %vm1553, %v1489, %v1617
        %v1682 = vsel %vm1554, %v1490, %v1618
        %v1683 = vsel %vm1555, %v1491, %v1619
        %v1684 = vsel %vm1556, %v1492, %v1620
        %v1685 = vsel %vm1557, %v1493, %v1621
        %v1686 = vsel %vm1558, %v1494, %v1622
        %v1687 = vsel %vm1559, %v1495, %v1623
        %v1688 = vsel %vm1560, %v1496, %v1624
        %v1689 = vsel %vm1561, %v1497, %v1625
        %v1690 = vsel %vm1562, %v1498, %v1626
        %v1691 = vsel %vm1563, %v1499, %v1627
        %v1692 = vsel %vm1564, %v1500, %v1628
        %v1693 = vsel %vm1565, %v1501, %v1629
        %v1694 = vsel %vm1566, %v1502, %v1630
        %v1695 = vsel %vm1567, %v1503, %v1631
        %v1696 = vsel %vm1568, %v1504, %v1632
        %v1697 = vsel %vm1569, %v1505, %v1633
        %v1698 = vsel %vm1570, %v1506, %v1634
        %v1699 = vsel %vm1571, %v1507, %v1635
        %v1700 = vsel %vm1572, %v1508, %v1636
        %v1701 = vsel %vm1573, %v1509, %v1637
        %v1702 = vsel %vm1574, %v1510, %v1638
        %v1703 = vsel %vm1575, %v1511, %v1639
        %v1704 = vsel %vm1576, %v1512, %v1640
        %v1705 = vsel %vm1577, %v1513, %v1641
        %v1706 = vsel %vm1578, %v1514, %v1642
        %v1707 = vsel %vm1579, %v1515, %v1643
        %v1708 = vsel %vm1580, %v1516, %v1644
        %v1709 = vsel %vm1581, %v1517, %v1645
        %v1710 = vsel %vm1582, %v1518, %v1646
        %v1711 = vsel %vm1583, %v1519, %v1647
        %v1712 = vsel %vm1584, %v1520, %v1648
        %v1713 = vsel %vm1585, %v1521, %v1649
        %v1714 = vsel %vm1586, %v1522, %v1650
        %v1715 = vsel %vm1587, %v1523, %v1651
        %v1716 = vsel %vm1588, %v1524, %v1652
        %v1717 = vsel %vm1589, %v1525, %v1653
        %v1718 = vsel %vm1590, %v1526, %v1654
        %v1719 = vmul.f32 %v1079, %v1655
        %v1720 = vmul.f32 %v1080, %v1656
        %v1721 = vmul.f32 %v1081, %v1657
        %v1722 = vmul.f32 %v1082, %v1658
        %v1723 = vmul.f32 %v1083, %v1659
        %v1724 = vmul.f32 %v1084, %v1660
        %v1725 = vmul.f32 %v1085, %v1661
        %v1726 = vmul.f32 %v1086, %v1662
        %v1727 = vmul.f32 %v1087, %v1663
        %v1728 = vmul.f32 %v1088, %v1664
        %v1729 = vmul.f32 %v1089, %v1665
        %v1730 = vmul.f32 %v1090, %v1666
        %v1731 = vmul.f32 %v1091, %v1667
        %v1732 = vmul.f32 %v1092, %v1668
        %v1733 = vmul.f32 %v1093, %v1669
        %v1734 = vmul.f32 %v1094, %v1670
        %v1735 = vmul.f32 %v1095, %v1671
        %v1736 = vmul.f32 %v1096, %v1672
        %v1737 = vmul.f32 %v1097, %v1673
        %v1738 = vmul.f32 %v1098, %v1674
        %v1739 = vmul.f32 %v1099, %v1675
        %v1740 = vmul.f32 %v1100, %v1676
        %v1741 = vmul.f32 %v1101, %v1677
        %v1742 = vmul.f32 %v1102, %v1678
        %v1743 = vmul.f32 %v1103, %v1679
        %v1744 = vmul.f32 %v1104, %v1680
        %v1745 = vmul.f32 %v1105, %v1681
        %v1746 = vmul.f32 %v1106, %v1682
        %v1747 = vmul.f32 %v1107, %v1683
        %v1748 = vmul.f32 %v1108, %v1684
        %v1749 = vmul.f32 %v1109, %v1685
        %v1750 = vmul.f32 %v1110, %v1686
        %v1751 = vmul.f32 %v1111, %v1687
        %v1752 = vmul.f32 %v1112, %v1688
        %v1753 = vmul.f32 %v1113, %v1689
        %v1754 = vmul.f32 %v1114, %v1690
        %v1755 = vmul.f32 %v1115, %v1691
        %v1756 = vmul.f32 %v1116, %v1692
        %v1757 = vmul.f32 %v1117, %v1693
        %v1758 = vmul.f32 %v1118, %v1694
        %v1759 = vmul.f32 %v1119, %v1695
        %v1760 = vmul.f32 %v1120, %v1696
        %v1761 = vmul.f32 %v1121, %v1697
        %v1762 = vmul.f32 %v1122, %v1698
        %v1763 = vmul.f32 %v1123, %v1699
        %v1764 = vmul.f32 %v1124, %v1700
        %v1765 = vmul.f32 %v1125, %v1701
        %v1766 = vmul.f32 %v1126, %v1702
        %v1767 = vmul.f32 %v1127, %v1703
        %v1768 = vmul.f32 %v1128, %v1704
        %v1769 = vmul.f32 %v1129, %v1705
        %v1770 = vmul.f32 %v1130, %v1706
        %v1771 = vmul.f32 %v1131, %v1707
        %v1772 = vmul.f32 %v1132, %v1708
        %v1773 = vmul.f32 %v1133, %v1709
        %v1774 = vmul.f32 %v1134, %v1710
        %v1775 = vmul.f32 %v1135, %v1711
        %v1776 = vmul.f32 %v1136, %v1712
        %v1777 = vmul.f32 %v1137, %v1713
        %v1778 = vmul.f32 %v1138, %v1714
        %v1779 = vmul.f32 %v1139, %v1715
        %v1780 = vmul.f32 %v1140, %v1716
        %v1781 = vmul.f32 %v1141, %v1717
        %v1782 = vmul.f32 %v1142, %v1718
        %1783 = vst [vmem:[%s257] sm:$0xff] %v1719
        %1784 = vst [vmem:[%s257 + $0x8] sm:$0xff] %v1720
        %1785 = vst [vmem:[%s257 + $0x10] sm:$0xff] %v1721
        %1786 = vst [vmem:[%s257 + $0x18] sm:$0xff] %v1722
        %1787 = vst [vmem:[%s257 + $0x20] sm:$0xff] %v1723
        %1788 = vst [vmem:[%s257 + $0x28] sm:$0xff] %v1724
        %1789 = vst [vmem:[%s257 + $0x30] sm:$0xff] %v1725
        %1790 = vst [vmem:[%s257 + $0x38] sm:$0xff] %v1726
        %1791 = vst [vmem:[%s257 + $0x40] sm:$0xff] %v1727
        %1792 = vst [vmem:[%s257 + $0x48] sm:$0xff] %v1728
        %1793 = vst [vmem:[%s257 + $0x50] sm:$0xff] %v1729
        %1794 = vst [vmem:[%s257 + $0x58] sm:$0xff] %v1730
        %1795 = vst [vmem:[%s257 + $0x60] sm:$0xff] %v1731
        %1796 = vst [vmem:[%s257 + $0x68] sm:$0xff] %v1732
        %1797 = vst [vmem:[%s257 + $0x70] sm:$0xff] %v1733
        %1798 = vst [vmem:[%s257 + $0x78] sm:$0xff] %v1734
        %1799 = vst [vmem:[%s257 + $0x80] sm:$0xff] %v1735
        %1800 = vst [vmem:[%s257 + $0x88] sm:$0xff] %v1736
        %1801 = vst [vmem:[%s257 + $0x90] sm:$0xff] %v1737
        %1802 = vst [vmem:[%s257 + $0x98] sm:$0xff] %v1738
        %1803 = vst [vmem:[%s257 + $0xa0] sm:$0xff] %v1739
        %1804 = vst [vmem:[%s257 + $0xa8] sm:$0xff] %v1740
        %1805 = vst [vmem:[%s257 + $0xb0] sm:$0xff] %v1741
        %1806 = vst [vmem:[%s257 + $0xb8] sm:$0xff] %v1742
        %1807 = vst [vmem:[%s257 + $0xc0] sm:$0xff] %v1743
        %1808 = vst [vmem:[%s257 + $0xc8] sm:$0xff] %v1744
        %1809 = vst [vmem:[%s257 + $0xd0] sm:$0xff] %v1745
        %1810 = vst [vmem:[%s257 + $0xd8] sm:$0xff] %v1746
        %1811 = vst [vmem:[%s257 + $0xe0] sm:$0xff] %v1747
        %1812 = vst [vmem:[%s257 + $0xe8] sm:$0xff] %v1748
        %1813 = vst [vmem:[%s257 + $0xf0] sm:$0xff] %v1749
        %1814 = vst [vmem:[%s257 + $0xf8] sm:$0xff] %v1750
        %1815 = vst [vmem:[%s257 + $0x100] sm:$0xff] %v1751
        %1816 = vst [vmem:[%s257 + $0x108] sm:$0xff] %v1752
        %1817 = vst [vmem:[%s257 + $0x110] sm:$0xff] %v1753
        %1818 = vst [vmem:[%s257 + $0x118] sm:$0xff] %v1754
        %1819 = vst [vmem:[%s257 + $0x120] sm:$0xff] %v1755
        %1820 = vst [vmem:[%s257 + $0x128] sm:$0xff] %v1756
        %1821 = vst [vmem:[%s257 + $0x130] sm:$0xff] %v1757
        %1822 = vst [vmem:[%s257 + $0x138] sm:$0xff] %v1758
        %1823 = vst [vmem:[%s257 + $0x140] sm:$0xff] %v1759
        %1824 = vst [vmem:[%s257 + $0x148] sm:$0xff] %v1760
        %1825 = vst [vmem:[%s257 + $0x150] sm:$0xff] %v1761
        %1826 = vst [vmem:[%s257 + $0x158] sm:$0xff] %v1762
        %1827 = vst [vmem:[%s257 + $0x160] sm:$0xff] %v1763
        %1828 = vst [vmem:[%s257 + $0x168] sm:$0xff] %v1764
        %1829 = vst [vmem:[%s257 + $0x170] sm:$0xff] %v1765
        %1830 = vst [vmem:[%s257 + $0x178] sm:$0xff] %v1766
        %1831 = vst [vmem:[%s257 + $0x180] sm:$0xff] %v1767
        %1832 = vst [vmem:[%s257 + $0x188] sm:$0xff] %v1768
        %1833 = vst [vmem:[%s257 + $0x190] sm:$0xff] %v1769
        %1834 = vst [vmem:[%s257 + $0x198] sm:$0xff] %v1770
        %1835 = vst [vmem:[%s257 + $0x1a0] sm:$0xff] %v1771
        %1836 = vst [vmem:[%s257 + $0x1a8] sm:$0xff] %v1772
        %1837 = vst [vmem:[%s257 + $0x1b0] sm:$0xff] %v1773
        %1838 = vst [vmem:[%s257 + $0x1b8] sm:$0xff] %v1774
        %1839 = vst [vmem:[%s257 + $0x1c0] sm:$0xff] %v1775
        %1840 = vst [vmem:[%s257 + $0x1c8] sm:$0xff] %v1776
        %1841 = vst [vmem:[%s257 + $0x1d0] sm:$0xff] %v1777
        %1842 = vst [vmem:[%s257 + $0x1d8] sm:$0xff] %v1778
        %1843 = vst [vmem:[%s257 + $0x1e0] sm:$0xff] %v1779
        %1844 = vst [vmem:[%s257 + $0x1e8] sm:$0xff] %v1780
        %1845 = vst [vmem:[%s257 + $0x1f0] sm:$0xff] %v1781
        %1846 = vst [vmem:[%s257 + $0x1f8] sm:$0xff] %v1782
      $region40: #{conv2d.1} parent=31 // pred_fallthru
        _
      %s1847 = smul.u32 64, %s19
      %p1848 = scmp.lt.s32.totalorder %s1847, 1023
      %s1849 = scalar_select %p1848, %s1847, 1023
      %p1850 = scmp.lt.s32.totalorder %s20, 0
      %s1851 = scalar_select %p1850, %s20, 0
      %s1852 = sadd.s32 %s1851, %s1849
      %s1853 = smul.addr %s1852, 8
      %s1854 = scalar_lea.vmem %s3, %s1853
      // Predicated region
      $region41: #{conv2d.1} parent=31 // pred_check
        %p1855 = pneg %p135
      $region42: #{conv2d.1} parent=31 // pred_check_branch
        %1857 = sbr.rel (%p1855) target = $region44
      $region43: #{conv2d.1} parent=31 // pred_region
        %s1858 = smul.u32 64, %s19
      $region44: #{conv2d.1} parent=31 // pred_fallthru
        _
    $region32: #{conv2d.1} parent=5 // pred_fallthru
      _
    %p1859 = scmp.le.s32.totalorder 2, %s9
    // Predicated region
    $region45: #{conv2d.1} parent=5 // pred_check
      %p1860 = pneg %p1859
    $region46: #{conv2d.1} parent=5 // pred_check_branch
      %1862 = sbr.rel (%p1860) target = $region48
    $region47: #{conv2d.1} parent=5 // pred_region
      %s1863 = ssub.s32 %s9, 2
      // Predicated region
      $region49: #{conv2d.1} parent=47 // pred_check
        %p1864 = pneg %p141
      $region50: #{conv2d.1} parent=47 // pred_check_branch
        %1866 = sbr.rel (%p1864) target = $region52
      $region51: #{conv2d.1} parent=47 // pred_region
        %s1867 = smul.u32 64, %s22
        %p1868 = scmp.lt.s32.totalorder %s1867, 1023
        %s1869 = scalar_select %p1868, %s1867, 1023
        %p1870 = scmp.lt.s32.totalorder %s23, 0
        %s1871 = scalar_select %p1870, %s23, 0
        %s1872 = sadd.s32 %s1871, %s1869
        %s1873 = smul.addr %s1872, 8
        %s1874 = scalar_lea.vmem %s3, %s1873
      $region52: #{conv2d.1} parent=47 // pred_fallthru
        _
    $region48: #{conv2d.1} parent=5 // pred_fallthru
      _
  $region6: #{conv2d.1} parent=0 // loop_footer
    %s13 = sadd.s32 1, %s9
  $region7: #{conv2d.1} parent=0 // loop_footer_branch
    %8 = sbr.rel target = $region3
  $region8: #{conv2d.1} parent=0 // loop_exit
    _

</llo_original>
